<compile_context>
chip_gen: v6e
topology: v6e:2x2x1
jax: 0.10.0
libtpu: 0.0.40
codegen_flags: <defaults>
</compile_context>

<pallas_src>
import math

import jax
import jax.numpy as jnp
from jax.experimental import pallas as pl
from jax.experimental.pallas import tpu as pltpu

# ----------------------- small, module-consistent shapes ---------------------
BATCH = 4          # batch size
NUM_COLS = 8       # number of table columns (the dim that is mean-pooled)
HIDDEN = 32        # hidden_dim
OUT_DIM = 2        # out_dim
NUM_LAYERS = 2     # num_layers
NUM_HEADS = 4      # heads in the semi-permeable attention
HEAD_DIM = HIDDEN // NUM_HEADS
LN_EPS = 1e-5      # PyTorch nn.LayerNorm default eps
BN = BATCH * NUM_COLS          # 32 folded (batch, column) rows
HB = NUM_HEADS * BN            # 128 rows: heads stacked on sublanes

# ----------------------------- slab row offsets ------------------------------
# bf16 weight slab `wb`  (rows, HIDDEN):
W_L_STRIDE = 8 * HIDDEN        # 8 blocks of 32 rows per layer
OFF_WQ = 0                     # diag(ln1_w) @ Wq * 1/sqrt(head_dim)
OFF_WK = 1 * HIDDEN            # diag(ln1_w) @ Wk
OFF_WVO = 2 * HIDDEN           # 4 blocks: diag(ln1_w) @ Wv_h @ Wo_h
OFF_WG = 6 * HIDDEN            # diag(ln2_w) @ W_gate
OFF_WL = 7 * HIDDEN            # diag(ln2_w) @ W_lin
OFF_POOL = NUM_LAYERS * W_L_STRIDE          # mean-pool matrix (padded to 32 rows)
OFF_FCW = OFF_POOL + HIDDEN                 # fc weight, lane-padded to (32, 32)
WB_ROWS = OFF_FCW + HIDDEN

# f32 constant slab `cf`  (rows, HIDDEN):
CF_X = 0                        # raw value broadcast over features
CF_PREW = 1 * BN                # pre-encoder weight, tiled over batch
CF_PREB = 2 * BN                # pre-encoder bias,   tiled over batch
CF_MASK = 3 * BN                # (HB, BN) additive mask, tiled over heads
CF_HEADM = CF_MASK + HB         # (HB, HIDDEN) 0/1 head-selection mask for q
CF_BIAS = CF_HEADM + HB         # per-layer folded biases, each broadcast to 32 rows
CF_BIAS_STRIDE = 5 * BN         # bq, bk, bvo_sum, bgate, blin
CF_HG = CF_BIAS + NUM_LAYERS * CF_BIAS_STRIDE   # head LayerNorm gamma (broadcast)
CF_HB = CF_HG + BN                              # head LayerNorm beta
CF_FCB = CF_HB + BN                             # fc bias (lane-padded, broadcast)
CF_ROWS = CF_FCB + BN


def _layer_norm(x, w, b):
    mu = jnp.mean(x, axis=-1, keepdims=True)
    var = jnp.mean((x - mu) ** 2, axis=-1, keepdims=True)
    return (x - mu) * jax.lax.rsqrt(var + LN_EPS) * w + b


def _normalize(x):
    # LayerNorm without the affine (the affine is folded into the next matmul).
    mu = jnp.mean(x, axis=-1, keepdims=True)
    xc = x - mu
    var = jnp.mean(xc * xc, axis=-1, keepdims=True)
    return xc * jax.lax.rsqrt(var + LN_EPS)


# ------------------------------ fused Pallas kernel ---------------------------
def excelformer_fused_kernel(wb_ref, cf_ref, o_ref):
    f32 = jnp.float32
    bf16 = jnp.bfloat16

    def cf(off, rows=BN):
        return cf_ref[off:off + rows, :]

    def wb(off):
        return wb_ref[off:off + HIDDEN, :]

    # ---- fused numerical pre-encoder (first ExcelFormerConv) ----
    x = cf(CF_X) * cf(CF_PREW) + cf(CF_PREB)                    # (BN, H) f32

    for l in range(NUM_LAYERS):                                 # static unroll
        w0 = l * W_L_STRIDE
        b0 = CF_BIAS + l * CF_BIAS_STRIDE

        # ---- semi-permeable attention (heads batched along sublanes) ----
        zn = _normalize(x)
        znb = zn.astype(bf16)
        q = jnp.dot(znb, wb(w0 + OFF_WQ), preferred_element_type=f32) + cf(b0)
        k = jnp.dot(znb, wb(w0 + OFF_WK), preferred_element_type=f32) + cf(b0 + BN)

        # stack q per head on sublanes, zero out the other heads' features
        q4 = jnp.concatenate([q, q, q, q], axis=0) * cf(CF_HEADM, HB)   # (HB, H)
        # scores for all heads at once: q @ k^T restricted per head-block
        s = jax.lax.dot_general(
            q4.astype(bf16), k.astype(bf16),
            (((1,), (1,)), ((), ())), preferred_element_type=f32)
        s = s + cf(CF_MASK, HB)                                  # block-diag x causal
        s = s - jnp.max(s, axis=-1, keepdims=True)               # f32
        p = jnp.exp(s)                                           # f32, EUP
        pn = p * pl.reciprocal(jnp.sum(p, axis=-1, keepdims=True), approx=True)

        # value path: G_h = P_h @ zn in one matmul, then per-head output proj
        g = jnp.dot(pn.astype(bf16), znb, preferred_element_type=f32)   # (HB, H)
        attn = cf(b0 + 2 * BN)                 # summed, pre-broadcast v/o bias
        for h in range(NUM_HEADS):             # 32-aligned sublane slices (free)
            attn = attn + jnp.dot(
                g[h * BN:(h + 1) * BN, :].astype(bf16),
                wb(w0 + OFF_WVO + h * HIDDEN),
                preferred_element_type=f32)
        x = x + attn

        # ---- gated tanh feed-forward (two matmuls, no lane slices) ----
        n2 = _normalize(x)
        n2b = n2.astype(bf16)
        gate = jnp.dot(n2b, wb(w0 + OFF_WG), preferred_element_type=f32) + cf(b0 + 3 * BN)
        lin = jnp.dot(n2b, wb(w0 + OFF_WL), preferred_element_type=f32) + cf(b0 + 4 * BN)
        x = x + jnp.tanh(gate) * lin

    # ---- head: mean over columns (as matmul), LayerNorm, ReLU, Linear ----
    pooled = jnp.dot(wb(OFF_POOL), x.astype(bf16), preferred_element_type=f32)
    hz = _normalize(pooled) * cf(CF_HG) + cf(CF_HB)
    hz = jnp.maximum(hz, 0.0)
    out = jnp.dot(hz.astype(bf16), wb(OFF_FCW), preferred_element_type=f32) + cf(CF_FCB)
    o_ref[...] = out.astype(o_ref.dtype)


# --------------------------- packing + pallas_call -----------------------------
def _pack_inputs(x_raw, params):
    f32 = jnp.float32
    B, N, H = BATCH, NUM_COLS, HIDDEN
    scale = 1.0 / math.sqrt(HEAD_DIM)
    ln_w, ln_b, fc_w, fc_b = params["head"]

    # ---------------- bf16 weight slab (all matmul RHS operands) --------------
    wrows = []
    for lp in params["convs"]:
        ln1_w, ln1_b, wq, wk, wv, wo, ln2_w, ln2_b, w1, b1g, w2, b2l = lp
        g1 = ln1_w.reshape(H, 1)            # fold LN affine: diag(g1) @ W
        g2 = ln2_w.reshape(H, 1)
        wrows.append(g1 * wq * scale)       # attention scale folded into Wq
        wrows.append(g1 * wk)
        for h in range(NUM_HEADS):          # fold Wv_h with Wo_h per head
            wvo_h = (wv[:, h * HEAD_DIM:(h + 1) * HEAD_DIM]
                     @ wo[h * HEAD_DIM:(h + 1) * HEAD_DIM, :])
            wrows.append(g1 * wvo_h)
        wrows.append(g2 * w1)
        wrows.append(g2 * w2)
    # mean-pool matrix (padded to 32 rows; rows >= BATCH are zero)
    rb = jax.lax.broadcasted_iota(jnp.int32, (H, BN), 0)
    cb = jax.lax.broadcasted_iota(jnp.int32, (H, BN), 1)
    pool = jnp.where((rb < B) & ((cb // N) == rb), 1.0 / N, 0.0).astype(f32)
    wrows.append(pool)
    # fc weight, lane-padded to (H, H)
    fcw_pad = jnp.zeros((H, H), f32).at[:, :OUT_DIM].set(fc_w)
    wrows.append(fcw_pad)
    wb = jnp.concatenate(wrows, axis=0).astype(jnp.bfloat16)     # (WB_ROWS, H)

    # ---------------- f32 constant / activation slab --------------------------
    crows = []
    crows.append(jnp.broadcast_to(x_raw.reshape(BN, 1), (BN, H)).astype(f32))
    crows.append(jnp.tile(params["pre_w"], (B, 1)).astype(f32))
    crows.append(jnp.tile(params["pre_b"], (B, 1)).astype(f32))
    # block-diagonal (same batch element) x causal (column j <= i) additive mask,
    # tiled over the 4 heads (heads stacked along sublanes)
    r = jax.lax.broadcasted_iota(jnp.int32, (BN, BN), 0)
    c = jax.lax.broadcasted_iota(jnp.int32, (BN, BN), 1)
    mask32 = jnp.where(((r // N) == (c // N)) & ((c % N) <= (r % N)),
                       0.0, -1e9).astype(f32)
    crows.append(jnp.tile(mask32, (NUM_HEADS, 1)))               # (HB, BN)
    # head-selection mask for the sublane-stacked q
    hr = jax.lax.broadcasted_iota(jnp.int32, (HB, H), 0) // BN
    hd = jax.lax.broadcasted_iota(jnp.int32, (HB, H), 1) // HEAD_DIM
    crows.append(jnp.where(hr == hd, 1.0, 0.0).astype(f32))      # (HB, H)
    # folded biases, each pre-broadcast to 32 rows (no row slicing in-kernel)
    ones_bn = jnp.ones((BN, 1), f32)
    for lp in params["convs"]:
        ln1_w, ln1_b, wq, wk, wv, wo, ln2_w, ln2_b, w1, b1g, w2, b2l = lp
        bq = (ln1_b @ wq) * scale
        bk = ln1_b @ wk
        bvo = ln1_b @ wv @ wo          # sum over heads of the folded v/o bias
        bg = ln2_b @ w1 + b1g
        bl = ln2_b @ w2 + b2l
        for bias in (bq, bk, bvo, bg, bl):
            crows.append(ones_bn * bias)
    crows.append(ones_bn * ln_w)       # head LayerNorm gamma
    crows.append(ones_bn * ln_b)       # head LayerNorm beta
    fcb_pad = jnp.zeros((1, H), f32).at[:, :OUT_DIM].set(fc_b)
    crows.append(ones_bn * fcb_pad)
    cf = jnp.concatenate(crows, axis=0).astype(f32)              # (CF_ROWS, H)

    return wb, cf


@jax.jit
def excelformer_forward(x_raw, params):
    wb, cf = _pack_inputs(x_raw, params)
    out = pl.pallas_call(
        excelformer_fused_kernel,
        out_shape=jax.ShapeDtypeStruct((BN, HIDDEN), jnp.float32),
        in_specs=[pl.BlockSpec(memory_space=pltpu.MemorySpace.VMEM),
                  pl.BlockSpec(memory_space=pltpu.MemorySpace.VMEM)],
        out_specs=pl.BlockSpec(memory_space=pltpu.MemorySpace.VMEM),
    )(wb, cf)
    return out[:BATCH, :OUT_DIM]


# ---------------------------- pure-JAX reference ------------------------------
def excelformer_reference(x_raw, params):
    x = x_raw[:, :, None] * params["pre_w"][None] + params["pre_b"][None]
    row = jax.lax.broadcasted_iota(jnp.int32, (NUM_COLS, NUM_COLS), 0)
    col = jax.lax.broadcasted_iota(jnp.int32, (NUM_COLS, NUM_COLS), 1)
    mask = jnp.where(col <= row, 0.0, -1e9).astype(jnp.float32)
    for lp in params["convs"]:
        ln1_w, ln1_b, wq, wk, wv, wo, ln2_w, ln2_b, w1, b1, w2, b2 = lp
        z = _layer_norm(x, ln1_w, ln1_b)
        q = z @ wq
        k = z @ wk
        v = z @ wv
        B, N, H = x.shape
        qh = q.reshape(B, N, NUM_HEADS, HEAD_DIM)
        kh = k.reshape(B, N, NUM_HEADS, HEAD_DIM)
        vh = v.reshape(B, N, NUM_HEADS, HEAD_DIM)
        s = jnp.einsum("bihd,bjhd->bhij", qh, kh) / math.sqrt(HEAD_DIM)
        s = s + mask[None, None]
        p = jax.nn.softmax(s, axis=-1)
        o = jnp.einsum("bhij,bjhd->bihd", p, vh).reshape(B, N, H) @ wo
        x = x + o
        z2 = _layer_norm(x, ln2_w, ln2_b)
        x = x + jnp.tanh(z2 @ w1 + b1) * (z2 @ w2 + b2)
    ln_w, ln_b, fc_w, fc_b = params["head"]
    pooled = jnp.mean(x, axis=1)
    z = jnp.maximum(_layer_norm(pooled, ln_w, ln_b), 0.0)
    return z @ fc_w + fc_b


# ------------------------------ parameter init --------------------------------
def init_params(key):
    keys = iter(jax.random.split(key, 8 * NUM_LAYERS + 8))
    scale = 1.0 / math.sqrt(HIDDEN)

    def lin(shape, s=scale):
        return jax.random.normal(next(keys), shape, jnp.float32) * s

    params = {
        "pre_w": jax.random.normal(next(keys), (NUM_COLS, HIDDEN), jnp.float32) * 0.5,
        "pre_b": jax.random.normal(next(keys), (NUM_COLS, HIDDEN), jnp.float32) * 0.1,
        "convs": [],
        "head": (
            jnp.ones((1, HIDDEN), jnp.float32),          # LayerNorm weight
            jnp.zeros((1, HIDDEN), jnp.float32),         # LayerNorm bias
            lin((HIDDEN, OUT_DIM)),                      # Linear weight
            jnp.zeros((1, OUT_DIM), jnp.float32),        # Linear bias
        ),
    }
    for _ in range(NUM_LAYERS):
        params["convs"].append((
            jnp.ones((1, HIDDEN), jnp.float32),          # ln1 weight
            jnp.zeros((1, HIDDEN), jnp.float32),         # ln1 bias
            lin((HIDDEN, HIDDEN)),                       # Wq
            lin((HIDDEN, HIDDEN)),                       # Wk
            lin((HIDDEN, HIDDEN)),                       # Wv
            lin((HIDDEN, HIDDEN)),                       # Wo
            jnp.ones((1, HIDDEN), jnp.float32),          # ln2 weight
            jnp.zeros((1, HIDDEN), jnp.float32),         # ln2 bias
            lin((HIDDEN, HIDDEN)),                       # AiuM gate weight
            jnp.zeros((1, HIDDEN), jnp.float32),         # AiuM gate bias
            lin((HIDDEN, HIDDEN)),                       # AiuM linear weight
            jnp.zeros((1, HIDDEN), jnp.float32),         # AiuM linear bias
        ))
    return params


if __name__ == "__main__":
    key = jax.random.PRNGKey(0)
    k_x, k_p = jax.random.split(key)

    x_raw = jax.random.normal(k_x, (BATCH, NUM_COLS), jnp.float32)
    params = init_params(k_p)

    # TODO(synk): real ExcelFormer sorts columns by mutual-information importance
    # before applying the semi-permeable mask; columns are assumed pre-sorted.
    out = excelformer_forward(x_raw, params)
    out = jax.block_until_ready(out)

    ref = excelformer_reference(x_raw, params)
    assert out.shape == (BATCH, OUT_DIM)
    # bf16 MXU operands (per perf review) -> bf16-appropriate tolerance;
    # softmax / LayerNorm / masking stay in f32.
    assert jnp.allclose(out, ref, atol=3e-2, rtol=3e-2), (out, ref)

    print("KERNEL_OK")
</pallas_src>

<mosaic_0001>
module attributes {stable_mosaic.version = 11 : i64} {
  func.func @excelformer_fused_kernel(%arg0: memref<576x32xbf16, #tpu.memory_space<vmem>>, %arg1: memref<768x32xf32, #tpu.memory_space<vmem>>, %arg2: memref<32x32xf32, #tpu.memory_space<vmem>>) attributes {dimension_semantics = [], scalar_prefetch = 0 : i64, scratch_operands = 0 : i64, tpu.core_type = #tpu.core_type<tc>} {
    %c0 = arith.constant 0 : index
    %c0_0 = arith.constant 0 : index
    %0 = vector.load %arg1[%c0, %c0_0] : memref<768x32xf32, #tpu.memory_space<vmem>>, vector<32x32xf32>
    %c32 = arith.constant 32 : index
    %c0_1 = arith.constant 0 : index
    %1 = vector.load %arg1[%c32, %c0_1] : memref<768x32xf32, #tpu.memory_space<vmem>>, vector<32x32xf32>
    %2 = arith.mulf %0, %1 : vector<32x32xf32>
    %c64 = arith.constant 64 : index
    %c0_2 = arith.constant 0 : index
    %3 = vector.load %arg1[%c64, %c0_2] : memref<768x32xf32, #tpu.memory_space<vmem>>, vector<32x32xf32>
    %4 = arith.addf %2, %3 : vector<32x32xf32>
    %cst = arith.constant dense<0.000000e+00> : vector<32xf32>
    %5 = vector.multi_reduction <add>, %4, %cst [1] : vector<32x32xf32> to vector<32xf32>
    %6 = vector.shape_cast %5 : vector<32xf32> to vector<32x1xf32>
    %cst_3 = arith.constant 3.200000e+01 : f32
    %7 = vector.broadcast %cst_3 : f32 to vector<32x1xf32>
    %8 = arith.divf %6, %7 : vector<32x1xf32>
    %9 = vector.broadcast %8 : vector<32x1xf32> to vector<32x32xf32>
    %10 = arith.subf %4, %9 : vector<32x32xf32>
    %11 = arith.mulf %10, %10 : vector<32x32xf32>
    %cst_4 = arith.constant dense<0.000000e+00> : vector<32xf32>
    %12 = vector.multi_reduction <add>, %11, %cst_4 [1] : vector<32x32xf32> to vector<32xf32>
    %13 = vector.shape_cast %12 : vector<32xf32> to vector<32x1xf32>
    %cst_5 = arith.constant 3.200000e+01 : f32
    %14 = vector.broadcast %cst_5 : f32 to vector<32x1xf32>
    %15 = arith.divf %13, %14 : vector<32x1xf32>
    %cst_6 = arith.constant 9.99999974E-6 : f32
    %16 = vector.broadcast %cst_6 : f32 to vector<32x1xf32>
    %17 = arith.addf %15, %16 : vector<32x1xf32>
    %18 = math.rsqrt %17 : vector<32x1xf32>
    %19 = vector.broadcast %18 : vector<32x1xf32> to vector<32x32xf32>
    %20 = arith.mulf %10, %19 : vector<32x32xf32>
    %21 = arith.truncf %20 : vector<32x32xf32> to vector<32x32xbf16>
    %c0_7 = arith.constant 0 : index
    %c0_8 = arith.constant 0 : index
    %22 = vector.load %arg0[%c0_7, %c0_8] : memref<576x32xbf16, #tpu.memory_space<vmem>>, vector<32x32xbf16>
    %cst_9 = arith.constant dense<0.000000e+00> : vector<32x32xf32>
    %23 = tpu.matmul %21, %22, %cst_9 {dimension_numbers = #tpu.dot_dimension_numbers<[1], [0], [0], [1], [0, 0, 1, 1], [], []>} : vector<32x32xbf16>, vector<32x32xbf16>, vector<32x32xf32> -> vector<32x32xf32>
    %c352 = arith.constant 352 : index
    %c0_10 = arith.constant 0 : index
    %24 = vector.load %arg1[%c352, %c0_10] : memref<768x32xf32, #tpu.memory_space<vmem>>, vector<32x32xf32>
    %25 = arith.addf %23, %24 : vector<32x32xf32>
    %c32_11 = arith.constant 32 : index
    %c0_12 = arith.constant 0 : index
    %26 = vector.load %arg0[%c32_11, %c0_12] : memref<576x32xbf16, #tpu.memory_space<vmem>>, vector<32x32xbf16>
    %cst_13 = arith.constant dense<0.000000e+00> : vector<32x32xf32>
    %27 = tpu.matmul %21, %26, %cst_13 {dimension_numbers = #tpu.dot_dimension_numbers<[1], [0], [0], [1], [0, 0, 1, 1], [], []>} : vector<32x32xbf16>, vector<32x32xbf16>, vector<32x32xf32> -> vector<32x32xf32>
    %c384 = arith.constant 384 : index
    %c0_14 = arith.constant 0 : index
    %28 = vector.load %arg1[%c384, %c0_14] : memref<768x32xf32, #tpu.memory_space<vmem>>, vector<32x32xf32>
    %29 = arith.addf %27, %28 : vector<32x32xf32>
    %30 = tpu.concatenate %25, %25, %25, %25 in 0 : vector<32x32xf32>, vector<32x32xf32>, vector<32x32xf32>, vector<32x32xf32> -> vector<128x32xf32>
    %c224 = arith.constant 224 : index
    %c0_15 = arith.constant 0 : index
    %31 = vector.load %arg1[%c224, %c0_15] : memref<768x32xf32, #tpu.memory_space<vmem>>, vector<128x32xf32>
    %32 = arith.mulf %30, %31 : vector<128x32xf32>
    %33 = arith.truncf %32 : vector<128x32xf32> to vector<128x32xbf16>
    %34 = arith.truncf %29 : vector<32x32xf32> to vector<32x32xbf16>
    %cst_16 = arith.constant dense<0.000000e+00> : vector<128x32xf32>
    %35 = tpu.matmul %33, %34, %cst_16 {dimension_numbers = #tpu.dot_dimension_numbers<[1], [1], [0], [0], [0, 0, 1, 0], [], []>} : vector<128x32xbf16>, vector<32x32xbf16>, vector<128x32xf32> -> vector<128x32xf32>
    %c96 = arith.constant 96 : index
    %c0_17 = arith.constant 0 : index
    %36 = vector.load %arg1[%c96, %c0_17] : memref<768x32xf32, #tpu.memory_space<vmem>>, vector<128x32xf32>
    %37 = arith.addf %35, %36 : vector<128x32xf32>
    %cst_18 = arith.constant dense<0xFF800000> : vector<128xf32>
    %38 = vector.multi_reduction <maximumf>, %37, %cst_18 [1] : vector<128x32xf32> to vector<128xf32>
    %39 = vector.shape_cast %38 : vector<128xf32> to vector<128x1xf32>
    %40 = vector.broadcast %39 : vector<128x1xf32> to vector<128x32xf32>
    %41 = arith.subf %37, %40 : vector<128x32xf32>
    %42 = math.exp %41 : vector<128x32xf32>
    %cst_19 = arith.constant dense<0.000000e+00> : vector<128xf32>
    %43 = vector.multi_reduction <add>, %42, %cst_19 [1] : vector<128x32xf32> to vector<128xf32>
    %44 = vector.shape_cast %43 : vector<128xf32> to vector<128x1xf32>
    %45 = tpu.reciprocal %44 {approx = true} : vector<128x1xf32> -> vector<128x1xf32>
    %46 = vector.broadcast %45 : vector<128x1xf32> to vector<128x32xf32>
    %47 = arith.mulf %42, %46 : vector<128x32xf32>
    %48 = arith.truncf %47 : vector<128x32xf32> to vector<128x32xbf16>
    %cst_20 = arith.constant dense<0.000000e+00> : vector<128x32xf32>
    %49 = tpu.matmul %48, %21, %cst_20 {dimension_numbers = #tpu.dot_dimension_numbers<[1], [0], [0], [1], [0, 0, 1, 1], [], []>} : vector<128x32xbf16>, vector<32x32xbf16>, vector<128x32xf32> -> vector<128x32xf32>
    %c416 = arith.constant 416 : index
    %c0_21 = arith.constant 0 : index
    %50 = vector.load %arg1[%c416, %c0_21] : memref<768x32xf32, #tpu.memory_space<vmem>>, vector<32x32xf32>
    %51 = vector.extract_strided_slice %49 {offsets = [0, 0], sizes = [32, 32], strides = [1, 1]} : vector<128x32xf32> to vector<32x32xf32>
    %52 = arith.truncf %51 : vector<32x32xf32> to vector<32x32xbf16>
    %c64_22 = arith.constant 64 : index
    %c0_23 = arith.constant 0 : index
    %53 = vector.load %arg0[%c64_22, %c0_23] : memref<576x32xbf16, #tpu.memory_space<vmem>>, vector<32x32xbf16>
    %cst_24 = arith.constant dense<0.000000e+00> : vector<32x32xf32>
    %54 = tpu.matmul %52, %53, %cst_24 {dimension_numbers = #tpu.dot_dimension_numbers<[1], [0], [0], [1], [0, 0, 1, 1], [], []>} : vector<32x32xbf16>, vector<32x32xbf16>, vector<32x32xf32> -> vector<32x32xf32>
    %55 = arith.addf %50, %54 : vector<32x32xf32>
    %56 = vector.extract_strided_slice %49 {offsets = [32, 0], sizes = [32, 32], strides = [1, 1]} : vector<128x32xf32> to vector<32x32xf32>
    %57 = arith.truncf %56 : vector<32x32xf32> to vector<32x32xbf16>
    %c96_25 = arith.constant 96 : index
    %c0_26 = arith.constant 0 : index
    %58 = vector.load %arg0[%c96_25, %c0_26] : memref<576x32xbf16, #tpu.memory_space<vmem>>, vector<32x32xbf16>
    %cst_27 = arith.constant dense<0.000000e+00> : vector<32x32xf32>
    %59 = tpu.matmul %57, %58, %cst_27 {dimension_numbers = #tpu.dot_dimension_numbers<[1], [0], [0], [1], [0, 0, 1, 1], [], []>} : vector<32x32xbf16>, vector<32x32xbf16>, vector<32x32xf32> -> vector<32x32xf32>
    %60 = arith.addf %55, %59 : vector<32x32xf32>
    %61 = vector.extract_strided_slice %49 {offsets = [64, 0], sizes = [32, 32], strides = [1, 1]} : vector<128x32xf32> to vector<32x32xf32>
    %62 = arith.truncf %61 : vector<32x32xf32> to vector<32x32xbf16>
    %c128 = arith.constant 128 : index
    %c0_28 = arith.constant 0 : index
    %63 = vector.load %arg0[%c128, %c0_28] : memref<576x32xbf16, #tpu.memory_space<vmem>>, vector<32x32xbf16>
    %cst_29 = arith.constant dense<0.000000e+00> : vector<32x32xf32>
    %64 = tpu.matmul %62, %63, %cst_29 {dimension_numbers = #tpu.dot_dimension_numbers<[1], [0], [0], [1], [0, 0, 1, 1], [], []>} : vector<32x32xbf16>, vector<32x32xbf16>, vector<32x32xf32> -> vector<32x32xf32>
    %65 = arith.addf %60, %64 : vector<32x32xf32>
    %66 = vector.extract_strided_slice %49 {offsets = [96, 0], sizes = [32, 32], strides = [1, 1]} : vector<128x32xf32> to vector<32x32xf32>
    %67 = arith.truncf %66 : vector<32x32xf32> to vector<32x32xbf16>
    %c160 = arith.constant 160 : index
    %c0_30 = arith.constant 0 : index
    %68 = vector.load %arg0[%c160, %c0_30] : memref<576x32xbf16, #tpu.memory_space<vmem>>, vector<32x32xbf16>
    %cst_31 = arith.constant dense<0.000000e+00> : vector<32x32xf32>
    %69 = tpu.matmul %67, %68, %cst_31 {dimension_numbers = #tpu.dot_dimension_numbers<[1], [0], [0], [1], [0, 0, 1, 1], [], []>} : vector<32x32xbf16>, vector<32x32xbf16>, vector<32x32xf32> -> vector<32x32xf32>
    %70 = arith.addf %65, %69 : vector<32x32xf32>
    %71 = arith.addf %4, %70 : vector<32x32xf32>
    %cst_32 = arith.constant dense<0.000000e+00> : vector<32xf32>
    %72 = vector.multi_reduction <add>, %71, %cst_32 [1] : vector<32x32xf32> to vector<32xf32>
    %73 = vector.shape_cast %72 : vector<32xf32> to vector<32x1xf32>
    %cst_33 = arith.constant 3.200000e+01 : f32
    %74 = vector.broadcast %cst_33 : f32 to vector<32x1xf32>
    %75 = arith.divf %73, %74 : vector<32x1xf32>
    %76 = vector.broadcast %75 : vector<32x1xf32> to vector<32x32xf32>
    %77 = arith.subf %71, %76 : vector<32x32xf32>
    %78 = arith.mulf %77, %77 : vector<32x32xf32>
    %cst_34 = arith.constant dense<0.000000e+00> : vector<32xf32>
    %79 = vector.multi_reduction <add>, %78, %cst_34 [1] : vector<32x32xf32> to vector<32xf32>
    %80 = vector.shape_cast %79 : vector<32xf32> to vector<32x1xf32>
    %cst_35 = arith.constant 3.200000e+01 : f32
    %81 = vector.broadcast %cst_35 : f32 to vector<32x1xf32>
    %82 = arith.divf %80, %81 : vector<32x1xf32>
    %cst_36 = arith.constant 9.99999974E-6 : f32
    %83 = vector.broadcast %cst_36 : f32 to vector<32x1xf32>
    %84 = arith.addf %82, %83 : vector<32x1xf32>
    %85 = math.rsqrt %84 : vector<32x1xf32>
    %86 = vector.broadcast %85 : vector<32x1xf32> to vector<32x32xf32>
    %87 = arith.mulf %77, %86 : vector<32x32xf32>
    %88 = arith.truncf %87 : vector<32x32xf32> to vector<32x32xbf16>
    %c192 = arith.constant 192 : index
    %c0_37 = arith.constant 0 : index
    %89 = vector.load %arg0[%c192, %c0_37] : memref<576x32xbf16, #tpu.memory_space<vmem>>, vector<32x32xbf16>
    %cst_38 = arith.constant dense<0.000000e+00> : vector<32x32xf32>
    %90 = tpu.matmul %88, %89, %cst_38 {dimension_numbers = #tpu.dot_dimension_numbers<[1], [0], [0], [1], [0, 0, 1, 1], [], []>} : vector<32x32xbf16>, vector<32x32xbf16>, vector<32x32xf32> -> vector<32x32xf32>
    %c448 = arith.constant 448 : index
    %c0_39 = arith.constant 0 : index
    %91 = vector.load %arg1[%c448, %c0_39] : memref<768x32xf32, #tpu.memory_space<vmem>>, vector<32x32xf32>
    %92 = arith.addf %90, %91 : vector<32x32xf32>
    %c224_40 = arith.constant 224 : index
    %c0_41 = arith.constant 0 : index
    %93 = vector.load %arg0[%c224_40, %c0_41] : memref<576x32xbf16, #tpu.memory_space<vmem>>, vector<32x32xbf16>
    %cst_42 = arith.constant dense<0.000000e+00> : vector<32x32xf32>
    %94 = tpu.matmul %88, %93, %cst_42 {dimension_numbers = #tpu.dot_dimension_numbers<[1], [0], [0], [1], [0, 0, 1, 1], [], []>} : vector<32x32xbf16>, vector<32x32xbf16>, vector<32x32xf32> -> vector<32x32xf32>
    %c480 = arith.constant 480 : index
    %c0_43 = arith.constant 0 : index
    %95 = vector.load %arg1[%c480, %c0_43] : memref<768x32xf32, #tpu.memory_space<vmem>>, vector<32x32xf32>
    %96 = arith.addf %94, %95 : vector<32x32xf32>
    %97 = math.tanh %92 : vector<32x32xf32>
    %98 = arith.mulf %97, %96 : vector<32x32xf32>
    %99 = arith.addf %71, %98 : vector<32x32xf32>
    %cst_44 = arith.constant dense<0.000000e+00> : vector<32xf32>
    %100 = vector.multi_reduction <add>, %99, %cst_44 [1] : vector<32x32xf32> to vector<32xf32>
    %101 = vector.shape_cast %100 : vector<32xf32> to vector<32x1xf32>
    %cst_45 = arith.constant 3.200000e+01 : f32
    %102 = vector.broadcast %cst_45 : f32 to vector<32x1xf32>
    %103 = arith.divf %101, %102 : vector<32x1xf32>
    %104 = vector.broadcast %103 : vector<32x1xf32> to vector<32x32xf32>
    %105 = arith.subf %99, %104 : vector<32x32xf32>
    %106 = arith.mulf %105, %105 : vector<32x32xf32>
    %cst_46 = arith.constant dense<0.000000e+00> : vector<32xf32>
    %107 = vector.multi_reduction <add>, %106, %cst_46 [1] : vector<32x32xf32> to vector<32xf32>
    %108 = vector.shape_cast %107 : vector<32xf32> to vector<32x1xf32>
    %cst_47 = arith.constant 3.200000e+01 : f32
    %109 = vector.broadcast %cst_47 : f32 to vector<32x1xf32>
    %110 = arith.divf %108, %109 : vector<32x1xf32>
    %cst_48 = arith.constant 9.99999974E-6 : f32
    %111 = vector.broadcast %cst_48 : f32 to vector<32x1xf32>
    %112 = arith.addf %110, %111 : vector<32x1xf32>
    %113 = math.rsqrt %112 : vector<32x1xf32>
    %114 = vector.broadcast %113 : vector<32x1xf32> to vector<32x32xf32>
    %115 = arith.mulf %105, %114 : vector<32x32xf32>
    %116 = arith.truncf %115 : vector<32x32xf32> to vector<32x32xbf16>
    %c256 = arith.constant 256 : index
    %c0_49 = arith.constant 0 : index
    %117 = vector.load %arg0[%c256, %c0_49] : memref<576x32xbf16, #tpu.memory_space<vmem>>, vector<32x32xbf16>
    %cst_50 = arith.constant dense<0.000000e+00> : vector<32x32xf32>
    %118 = tpu.matmul %116, %117, %cst_50 {dimension_numbers = #tpu.dot_dimension_numbers<[1], [0], [0], [1], [0, 0, 1, 1], [], []>} : vector<32x32xbf16>, vector<32x32xbf16>, vector<32x32xf32> -> vector<32x32xf32>
    %c512 = arith.constant 512 : index
    %c0_51 = arith.constant 0 : index
    %119 = vector.load %arg1[%c512, %c0_51] : memref<768x32xf32, #tpu.memory_space<vmem>>, vector<32x32xf32>
    %120 = arith.addf %118, %119 : vector<32x32xf32>
    %c288 = arith.constant 288 : index
    %c0_52 = arith.constant 0 : index
    %121 = vector.load %arg0[%c288, %c0_52] : memref<576x32xbf16, #tpu.memory_space<vmem>>, vector<32x32xbf16>
    %cst_53 = arith.constant dense<0.000000e+00> : vector<32x32xf32>
    %122 = tpu.matmul %116, %121, %cst_53 {dimension_numbers = #tpu.dot_dimension_numbers<[1], [0], [0], [1], [0, 0, 1, 1], [], []>} : vector<32x32xbf16>, vector<32x32xbf16>, vector<32x32xf32> -> vector<32x32xf32>
    %c544 = arith.constant 544 : index
    %c0_54 = arith.constant 0 : index
    %123 = vector.load %arg1[%c544, %c0_54] : memref<768x32xf32, #tpu.memory_space<vmem>>, vector<32x32xf32>
    %124 = arith.addf %122, %123 : vector<32x32xf32>
    %125 = tpu.concatenate %120, %120, %120, %120 in 0 : vector<32x32xf32>, vector<32x32xf32>, vector<32x32xf32>, vector<32x32xf32> -> vector<128x32xf32>
    %c224_55 = arith.constant 224 : index
    %c0_56 = arith.constant 0 : index
    %126 = vector.load %arg1[%c224_55, %c0_56] : memref<768x32xf32, #tpu.memory_space<vmem>>, vector<128x32xf32>
    %127 = arith.mulf %125, %126 : vector<128x32xf32>
    %128 = arith.truncf %127 : vector<128x32xf32> to vector<128x32xbf16>
    %129 = arith.truncf %124 : vector<32x32xf32> to vector<32x32xbf16>
    %cst_57 = arith.constant dense<0.000000e+00> : vector<128x32xf32>
    %130 = tpu.matmul %128, %129, %cst_57 {dimension_numbers = #tpu.dot_dimension_numbers<[1], [1], [0], [0], [0, 0, 1, 0], [], []>} : vector<128x32xbf16>, vector<32x32xbf16>, vector<128x32xf32> -> vector<128x32xf32>
    %c96_58 = arith.constant 96 : index
    %c0_59 = arith.constant 0 : index
    %131 = vector.load %arg1[%c96_58, %c0_59] : memref<768x32xf32, #tpu.memory_space<vmem>>, vector<128x32xf32>
    %132 = arith.addf %130, %131 : vector<128x32xf32>
    %cst_60 = arith.constant dense<0xFF800000> : vector<128xf32>
    %133 = vector.multi_reduction <maximumf>, %132, %cst_60 [1] : vector<128x32xf32> to vector<128xf32>
    %134 = vector.shape_cast %133 : vector<128xf32> to vector<128x1xf32>
    %135 = vector.broadcast %134 : vector<128x1xf32> to vector<128x32xf32>
    %136 = arith.subf %132, %135 : vector<128x32xf32>
    %137 = math.exp %136 : vector<128x32xf32>
    %cst_61 = arith.constant dense<0.000000e+00> : vector<128xf32>
    %138 = vector.multi_reduction <add>, %137, %cst_61 [1] : vector<128x32xf32> to vector<128xf32>
    %139 = vector.shape_cast %138 : vector<128xf32> to vector<128x1xf32>
    %140 = tpu.reciprocal %139 {approx = true} : vector<128x1xf32> -> vector<128x1xf32>
    %141 = vector.broadcast %140 : vector<128x1xf32> to vector<128x32xf32>
    %142 = arith.mulf %137, %141 : vector<128x32xf32>
    %143 = arith.truncf %142 : vector<128x32xf32> to vector<128x32xbf16>
    %cst_62 = arith.constant dense<0.000000e+00> : vector<128x32xf32>
    %144 = tpu.matmul %143, %116, %cst_62 {dimension_numbers = #tpu.dot_dimension_numbers<[1], [0], [0], [1], [0, 0, 1, 1], [], []>} : vector<128x32xbf16>, vector<32x32xbf16>, vector<128x32xf32> -> vector<128x32xf32>
    %c576 = arith.constant 576 : index
    %c0_63 = arith.constant 0 : index
    %145 = vector.load %arg1[%c576, %c0_63] : memref<768x32xf32, #tpu.memory_space<vmem>>, vector<32x32xf32>
    %146 = vector.extract_strided_slice %144 {offsets = [0, 0], sizes = [32, 32], strides = [1, 1]} : vector<128x32xf32> to vector<32x32xf32>
    %147 = arith.truncf %146 : vector<32x32xf32> to vector<32x32xbf16>
    %c320 = arith.constant 320 : index
    %c0_64 = arith.constant 0 : index
    %148 = vector.load %arg0[%c320, %c0_64] : memref<576x32xbf16, #tpu.memory_space<vmem>>, vector<32x32xbf16>
    %cst_65 = arith.constant dense<0.000000e+00> : vector<32x32xf32>
    %149 = tpu.matmul %147, %148, %cst_65 {dimension_numbers = #tpu.dot_dimension_numbers<[1], [0], [0], [1], [0, 0, 1, 1], [], []>} : vector<32x32xbf16>, vector<32x32xbf16>, vector<32x32xf32> -> vector<32x32xf32>
    %150 = arith.addf %145, %149 : vector<32x32xf32>
    %151 = vector.extract_strided_slice %144 {offsets = [32, 0], sizes = [32, 32], strides = [1, 1]} : vector<128x32xf32> to vector<32x32xf32>
    %152 = arith.truncf %151 : vector<32x32xf32> to vector<32x32xbf16>
    %c352_66 = arith.constant 352 : index
    %c0_67 = arith.constant 0 : index
    %153 = vector.load %arg0[%c352_66, %c0_67] : memref<576x32xbf16, #tpu.memory_space<vmem>>, vector<32x32xbf16>
    %cst_68 = arith.constant dense<0.000000e+00> : vector<32x32xf32>
    %154 = tpu.matmul %152, %153, %cst_68 {dimension_numbers = #tpu.dot_dimension_numbers<[1], [0], [0], [1], [0, 0, 1, 1], [], []>} : vector<32x32xbf16>, vector<32x32xbf16>, vector<32x32xf32> -> vector<32x32xf32>
    %155 = arith.addf %150, %154 : vector<32x32xf32>
    %156 = vector.extract_strided_slice %144 {offsets = [64, 0], sizes = [32, 32], strides = [1, 1]} : vector<128x32xf32> to vector<32x32xf32>
    %157 = arith.truncf %156 : vector<32x32xf32> to vector<32x32xbf16>
    %c384_69 = arith.constant 384 : index
    %c0_70 = arith.constant 0 : index
    %158 = vector.load %arg0[%c384_69, %c0_70] : memref<576x32xbf16, #tpu.memory_space<vmem>>, vector<32x32xbf16>
    %cst_71 = arith.constant dense<0.000000e+00> : vector<32x32xf32>
    %159 = tpu.matmul %157, %158, %cst_71 {dimension_numbers = #tpu.dot_dimension_numbers<[1], [0], [0], [1], [0, 0, 1, 1], [], []>} : vector<32x32xbf16>, vector<32x32xbf16>, vector<32x32xf32> -> vector<32x32xf32>
    %160 = arith.addf %155, %159 : vector<32x32xf32>
    %161 = vector.extract_strided_slice %144 {offsets = [96, 0], sizes = [32, 32], strides = [1, 1]} : vector<128x32xf32> to vector<32x32xf32>
    %162 = arith.truncf %161 : vector<32x32xf32> to vector<32x32xbf16>
    %c416_72 = arith.constant 416 : index
    %c0_73 = arith.constant 0 : index
    %163 = vector.load %arg0[%c416_72, %c0_73] : memref<576x32xbf16, #tpu.memory_space<vmem>>, vector<32x32xbf16>
    %cst_74 = arith.constant dense<0.000000e+00> : vector<32x32xf32>
    %164 = tpu.matmul %162, %163, %cst_74 {dimension_numbers = #tpu.dot_dimension_numbers<[1], [0], [0], [1], [0, 0, 1, 1], [], []>} : vector<32x32xbf16>, vector<32x32xbf16>, vector<32x32xf32> -> vector<32x32xf32>
    %165 = arith.addf %160, %164 : vector<32x32xf32>
    %166 = arith.addf %99, %165 : vector<32x32xf32>
    %cst_75 = arith.constant dense<0.000000e+00> : vector<32xf32>
    %167 = vector.multi_reduction <add>, %166, %cst_75 [1] : vector<32x32xf32> to vector<32xf32>
    %168 = vector.shape_cast %167 : vector<32xf32> to vector<32x1xf32>
    %cst_76 = arith.constant 3.200000e+01 : f32
    %169 = vector.broadcast %cst_76 : f32 to vector<32x1xf32>
    %170 = arith.divf %168, %169 : vector<32x1xf32>
    %171 = vector.broadcast %170 : vector<32x1xf32> to vector<32x32xf32>
    %172 = arith.subf %166, %171 : vector<32x32xf32>
    %173 = arith.mulf %172, %172 : vector<32x32xf32>
    %cst_77 = arith.constant dense<0.000000e+00> : vector<32xf32>
    %174 = vector.multi_reduction <add>, %173, %cst_77 [1] : vector<32x32xf32> to vector<32xf32>
    %175 = vector.shape_cast %174 : vector<32xf32> to vector<32x1xf32>
    %cst_78 = arith.constant 3.200000e+01 : f32
    %176 = vector.broadcast %cst_78 : f32 to vector<32x1xf32>
    %177 = arith.divf %175, %176 : vector<32x1xf32>
    %cst_79 = arith.constant 9.99999974E-6 : f32
    %178 = vector.broadcast %cst_79 : f32 to vector<32x1xf32>
    %179 = arith.addf %177, %178 : vector<32x1xf32>
    %180 = math.rsqrt %179 : vector<32x1xf32>
    %181 = vector.broadcast %180 : vector<32x1xf32> to vector<32x32xf32>
    %182 = arith.mulf %172, %181 : vector<32x32xf32>
    %183 = arith.truncf %182 : vector<32x32xf32> to vector<32x32xbf16>
    %c448_80 = arith.constant 448 : index
    %c0_81 = arith.constant 0 : index
    %184 = vector.load %arg0[%c448_80, %c0_81] : memref<576x32xbf16, #tpu.memory_space<vmem>>, vector<32x32xbf16>
    %cst_82 = arith.constant dense<0.000000e+00> : vector<32x32xf32>
    %185 = tpu.matmul %183, %184, %cst_82 {dimension_numbers = #tpu.dot_dimension_numbers<[1], [0], [0], [1], [0, 0, 1, 1], [], []>} : vector<32x32xbf16>, vector<32x32xbf16>, vector<32x32xf32> -> vector<32x32xf32>
    %c608 = arith.constant 608 : index
    %c0_83 = arith.constant 0 : index
    %186 = vector.load %arg1[%c608, %c0_83] : memref<768x32xf32, #tpu.memory_space<vmem>>, vector<32x32xf32>
    %187 = arith.addf %185, %186 : vector<32x32xf32>
    %c480_84 = arith.constant 480 : index
    %c0_85 = arith.constant 0 : index
    %188 = vector.load %arg0[%c480_84, %c0_85] : memref<576x32xbf16, #tpu.memory_space<vmem>>, vector<32x32xbf16>
    %cst_86 = arith.constant dense<0.000000e+00> : vector<32x32xf32>
    %189 = tpu.matmul %183, %188, %cst_86 {dimension_numbers = #tpu.dot_dimension_numbers<[1], [0], [0], [1], [0, 0, 1, 1], [], []>} : vector<32x32xbf16>, vector<32x32xbf16>, vector<32x32xf32> -> vector<32x32xf32>
    %c640 = arith.constant 640 : index
    %c0_87 = arith.constant 0 : index
    %190 = vector.load %arg1[%c640, %c0_87] : memref<768x32xf32, #tpu.memory_space<vmem>>, vector<32x32xf32>
    %191 = arith.addf %189, %190 : vector<32x32xf32>
    %192 = math.tanh %187 : vector<32x32xf32>
    %193 = arith.mulf %192, %191 : vector<32x32xf32>
    %194 = arith.addf %166, %193 : vector<32x32xf32>
    %c512_88 = arith.constant 512 : index
    %c0_89 = arith.constant 0 : index
    %195 = vector.load %arg0[%c512_88, %c0_89] : memref<576x32xbf16, #tpu.memory_space<vmem>>, vector<32x32xbf16>
    %196 = arith.truncf %194 : vector<32x32xf32> to vector<32x32xbf16>
    %cst_90 = arith.constant dense<0.000000e+00> : vector<32x32xf32>
    %197 = tpu.matmul %195, %196, %cst_90 {dimension_numbers = #tpu.dot_dimension_numbers<[1], [0], [0], [1], [0, 0, 1, 1], [], []>} : vector<32x32xbf16>, vector<32x32xbf16>, vector<32x32xf32> -> vector<32x32xf32>
    %cst_91 = arith.constant dense<0.000000e+00> : vector<32xf32>
    %198 = vector.multi_reduction <add>, %197, %cst_91 [1] : vector<32x32xf32> to vector<32xf32>
    %199 = vector.shape_cast %198 : vector<32xf32> to vector<32x1xf32>
    %cst_92 = arith.constant 3.200000e+01 : f32
    %200 = vector.broadcast %cst_92 : f32 to vector<32x1xf32>
    %201 = arith.divf %199, %200 : vector<32x1xf32>
    %202 = vector.broadcast %201 : vector<32x1xf32> to vector<32x32xf32>
    %203 = arith.subf %197, %202 : vector<32x32xf32>
    %204 = arith.mulf %203, %203 : vector<32x32xf32>
    %cst_93 = arith.constant dense<0.000000e+00> : vector<32xf32>
    %205 = vector.multi_reduction <add>, %204, %cst_93 [1] : vector<32x32xf32> to vector<32xf32>
    %206 = vector.shape_cast %205 : vector<32xf32> to vector<32x1xf32>
    %cst_94 = arith.constant 3.200000e+01 : f32
    %207 = vector.broadcast %cst_94 : f32 to vector<32x1xf32>
    %208 = arith.divf %206, %207 : vector<32x1xf32>
    %cst_95 = arith.constant 9.99999974E-6 : f32
    %209 = vector.broadcast %cst_95 : f32 to vector<32x1xf32>
    %210 = arith.addf %208, %209 : vector<32x1xf32>
    %211 = math.rsqrt %210 : vector<32x1xf32>
    %212 = vector.broadcast %211 : vector<32x1xf32> to vector<32x32xf32>
    %213 = arith.mulf %203, %212 : vector<32x32xf32>
    %c672 = arith.constant 672 : index
    %c0_96 = arith.constant 0 : index
    %214 = vector.load %arg1[%c672, %c0_96] : memref<768x32xf32, #tpu.memory_space<vmem>>, vector<32x32xf32>
    %215 = arith.mulf %213, %214 : vector<32x32xf32>
    %c704 = arith.constant 704 : index
    %c0_97 = arith.constant 0 : index
    %216 = vector.load %arg1[%c704, %c0_97] : memref<768x32xf32, #tpu.memory_space<vmem>>, vector<32x32xf32>
    %217 = arith.addf %215, %216 : vector<32x32xf32>
    %cst_98 = arith.constant 0.000000e+00 : f32
    %218 = vector.broadcast %cst_98 : f32 to vector<32x32xf32>
    %219 = arith.maximumf %217, %218 : vector<32x32xf32>
    %220 = arith.truncf %219 : vector<32x32xf32> to vector<32x32xbf16>
    %c544_99 = arith.constant 544 : index
    %c0_100 = arith.constant 0 : index
    %221 = vector.load %arg0[%c544_99, %c0_100] : memref<576x32xbf16, #tpu.memory_space<vmem>>, vector<32x32xbf16>
    %cst_101 = arith.constant dense<0.000000e+00> : vector<32x32xf32>
    %222 = tpu.matmul %220, %221, %cst_101 {dimension_numbers = #tpu.dot_dimension_numbers<[1], [0], [0], [1], [0, 0, 1, 1], [], []>} : vector<32x32xbf16>, vector<32x32xbf16>, vector<32x32xf32> -> vector<32x32xf32>
    %c736 = arith.constant 736 : index
    %c0_102 = arith.constant 0 : index
    %223 = vector.load %arg1[%c736, %c0_102] : memref<768x32xf32, #tpu.memory_space<vmem>>, vector<32x32xf32>
    %224 = arith.addf %222, %223 : vector<32x32xf32>
    %c0_103 = arith.constant 0 : index
    %c0_104 = arith.constant 0 : index
    %225 = vector.load %arg2[%c0_103, %c0_104] : memref<32x32xf32, #tpu.memory_space<vmem>>, vector<32x32xf32>
    tpu.vector_store %arg2[%c0_103, %c0_104], %224 {strides = array<i32>} : memref<32x32xf32, #tpu.memory_space<vmem>>, vector<32x32xf32>,
    return
  }
}

</mosaic_0001>

<llo_original>
// kernel: excelformer_forward.1
$region0: #{excelformer_forward.1}
  #allocation0 [shape = 'u32[]', space=smem, size = 0x4, offset = 0x4, fixed_abs, tag = 'smem constant byte address 0x4 - core index']
  #allocation1 [shape = 'u32[144,128]{1,0:T(1,128)}', space=vmem, size = 0x12000, scoped, tag = 'internal scratch']
  %s0 = inlined_call_operand.vmem [shape: bf16[576,32], index: 0, kind: input, shape index: {}]
  %s1 = inlined_call_operand.vmem [shape: f32[768,32], index: 1, kind: input, shape index: {}]
  %s2 = inlined_call_operand.vmem [shape: f32[32,32], index: 2, kind: output, shape index: {}]
  %s3 = sld [smem:[#allocation0]]
  $region18: #{excelformer_forward.1} parent=0
    _
  %s5 = ssub.s32 1, %s3
  %s6 = scalar_select 0, %s5, %s3
  // Predicated region
  $region2: #{excelformer_forward.1} parent=0 // pred_check
    _
  $region3: #{excelformer_forward.1} parent=0 // pred_check_branch
    %8 = sbr.rel (0) target = $region5
  $region4: #{excelformer_forward.1} parent=0 // pred_region
    _
  $region5: #{excelformer_forward.1} parent=0 // pred_fallthru
    _
  // Predicated region
  $region6: #{excelformer_forward.1} parent=0 // pred_check
    _
  $region7: #{excelformer_forward.1} parent=0 // pred_check_branch
    %10 = sbr.rel (0) target = $region9
  $region8: #{excelformer_forward.1} parent=0 // pred_region
    _
  $region9: #{excelformer_forward.1} parent=0 // pred_fallthru
    _
  %v12 = vld [vmem:[%s1] sm:$0xff]
  %v13 = vld [vmem:[%s1 + $0x8] sm:$0xff]
  %v14 = vld [vmem:[%s1 + $0x10] sm:$0xff]
  %v15 = vld [vmem:[%s1 + $0x18] sm:$0xff]
  %v16 = vld [vmem:[%s1 + $0x20] sm:$0xff]
  %v17 = vld [vmem:[%s1 + $0x28] sm:$0xff]
  %v18 = vld [vmem:[%s1 + $0x30] sm:$0xff]
  %v19 = vld [vmem:[%s1 + $0x38] sm:$0xff]
  %v20 = vmul.f32 %v12, %v16
  %v21 = vmul.f32 %v13, %v17
  %v22 = vmul.f32 %v14, %v18
  %v23 = vmul.f32 %v15, %v19
  %v24 = vld [vmem:[%s1 + $0x40] sm:$0xff]
  %v25 = vld [vmem:[%s1 + $0x48] sm:$0xff]
  %v26 = vld [vmem:[%s1 + $0x50] sm:$0xff]
  %v27 = vld [vmem:[%s1 + $0x58] sm:$0xff]
  %v28 = vadd.f32 %v20, %v24
  %v29 = vadd.f32 %v21, %v25
  %v30 = vadd.f32 %v22, %v26
  %v31 = vadd.f32 %v23, %v27
  %vm32 = vcmask 261120
  %v33 = vsel %vm32, %v28, 0.0
  %34 = vadd.xlane.f32.xlu0 %v33
  %v35 = vpop.xlane.xlu0 %34
  %v36 = vsel %vm32, %v29, 0.0
  %37 = vadd.xlane.f32.xlu0 %v36
  %v38 = vpop.xlane.xlu0 %37
  %v39 = vsel %vm32, %v30, 0.0
  %40 = vadd.xlane.f32.xlu0 %v39
  %v41 = vpop.xlane.xlu0 %40
  %v42 = vsel %vm32, %v31, 0.0
  %43 = vadd.xlane.f32.xlu0 %v42
  %v44 = vpop.xlane.xlu0 %43
  %v45 = vrcp.pop 32.0
  %v46 = vmul.f32 %v35, %v45
  %v47 = vmul.f32 %v38, %v45
  %v48 = vmul.f32 %v41, %v45
  %v49 = vmul.f32 %v44, %v45
  %v50 = vsub.f32 %v28, %v46
  %v51 = vsub.f32 %v29, %v47
  %v52 = vsub.f32 %v30, %v48
  %v53 = vsub.f32 %v31, %v49
  %v54 = vmul.f32 %v50, %v50
  %v55 = vmul.f32 %v51, %v51
  %v56 = vmul.f32 %v52, %v52
  %v57 = vmul.f32 %v53, %v53
  %v58 = vsel %vm32, %v54, 0.0
  %59 = vadd.xlane.f32.xlu0 %v58
  %v60 = vpop.xlane.xlu0 %59
  %v61 = vsel %vm32, %v55, 0.0
  %62 = vadd.xlane.f32.xlu0 %v61
  %v63 = vpop.xlane.xlu0 %62
  %v64 = vsel %vm32, %v56, 0.0
  %65 = vadd.xlane.f32.xlu0 %v64
  %v66 = vpop.xlane.xlu0 %65
  %v67 = vsel %vm32, %v57, 0.0
  %68 = vadd.xlane.f32.xlu0 %v67
  %v69 = vpop.xlane.xlu0 %68
  %v70 = vmul.f32 %v60, %v45
  %v71 = vmul.f32 %v63, %v45
  %v72 = vmul.f32 %v66, %v45
  %v73 = vmul.f32 %v69, %v45
  %v74 = vadd.f32 %v70, 1e-05
  %v75 = vadd.f32 %v71, 1e-05
  %v76 = vadd.f32 %v72, 1e-05
  %v77 = vadd.f32 %v73, 1e-05
  %v78 = vrsqrt.pop %v74
  %v79 = vrsqrt.pop %v75
  %v80 = vrsqrt.pop %v76
  %v81 = vrsqrt.pop %v77
  %v82 = vmul.f32 %v50, %v78
  %v83 = vmul.f32 %v51, %v79
  %v84 = vmul.f32 %v52, %v80
  %v85 = vmul.f32 %v53, %v81
  %v86 = vpack.c.bf16 %v83, %v82
  %v87 = vpack.c.bf16 %v85, %v84
  %v88 = vld [vmem:[%s0] sm:$0xf]
  %v89 = vld [vmem:[%s0 + $0x4] sm:$0xf]
  %v90 = vld [vmem:[%s0 + $0x8] sm:$0xf]
  %v91 = vld [vmem:[%s0 + $0xc] sm:$0xf]
  %v92 = vld [vmem:[%s1 + $0x160] sm:$0xff]
  %v93 = vld [vmem:[%s1 + $0x168] sm:$0xff]
  %v94 = vld [vmem:[%s1 + $0x170] sm:$0xff]
  %v95 = vld [vmem:[%s1 + $0x178] sm:$0xff]
  %v100 = vunpack.c.l.b16 %v88
  %v101 = vunpack.c.l.b16 %v89
  %v102 = vunpack.c.l.b16 %v90
  %v103 = vunpack.c.l.b16 %v91
  %v104 = vpack.c.b16 %v101, %v100
  %v105 = vpack.c.b16 %v103, %v102
  %v109 = vsel %vm32, %v86, 0
  %v112 = vsel %vm32, %v87, 0
  %114 = vmatprep.subr.bf16.mxu0 0
  %115 = vmatpush1.bf16.msra.mxu0 0
  %116 = vmatprep.subr.bf16.mxu0 0
  %117 = vmatpush1.bf16.msra.mxu0 0
  %118 = vmatprep.subr.bf16.mxu0 0
  %119 = vmatpush1.bf16.msra.mxu0 0
  %120 = vmatprep.subr.bf16.mxu0 0
  %121 = vmatpush1.bf16.msra.mxu0 0
  %122 = vmatprep.subr.bf16.mxu0 0
  %123 = vmatpush1.bf16.msra.mxu0 0
  %124 = vmatprep.subr.bf16.mxu0 0
  %125 = vmatpush1.bf16.msra.mxu0 0
  %126 = vmatprep.subr.bf16.mxu0 0
  %127 = vmatpush1.bf16.msra.mxu0 %v105
  %128 = vmatprep.subr.bf16.mxu0 0
  %129 = vmatpush1.bf16.msra.mxu0 %v104
  %130 = vmatprep.subr.bf16.mxu0 0
  %131 = vmatpush2.bf16.msra.mxu0 0
  %132 = vmatprep.subr.bf16.mxu0 0
  %133 = vmatpush2.bf16.msra.mxu0 0
  %134 = vmatprep.subr.bf16.mxu0 0
  %135 = vmatpush2.bf16.msra.mxu0 0
  %136 = vmatprep.subr.bf16.mxu0 0
  %137 = vmatpush2.bf16.msra.mxu0 0
  %138 = vmatprep.subr.bf16.mxu0 0
  %139 = vmatpush2.bf16.msra.mxu0 0
  %140 = vmatprep.subr.bf16.mxu0 0
  %141 = vmatpush2.bf16.msra.mxu0 0
  %142 = vmatprep.subr.bf16.mxu0 0
  %143 = vmatpush2.bf16.msra.mxu0 0
  %144 = vmatprep.subr.bf16.mxu0 0
  %145 = vmatpush2.bf16.msra.mxu0 0
  %146 = vmatprep.mubr.bf16.mxu0 0
  %147 = vmatmul.mubr.bf16.gmra.mxu0 %v109
  %v148 = vpop.f32.mrf.mxu0
  %v149 = vadd.f32 %v92, %v148
  %v150 = vpop.f32.mrf.mxu0
  %v151 = vpop.f32.mrf.mxu0
  %v152 = vadd.f32 %v93, %v151
  %v153 = vpop.f32.mrf.mxu0
  %154 = vmatprep.mubr.bf16.mxu0 0
  %155 = vmatmul.mubr.bf16.gmra.mxu0 %v112
  %v156 = vpop.f32.mrf.mxu0
  %v157 = vadd.f32 %v94, %v156
  %v158 = vpop.f32.mrf.mxu0
  %v159 = vpop.f32.mrf.mxu0
  %v160 = vadd.f32 %v95, %v159
  %v161 = vpop.f32.mrf.mxu0
  %162 = vdwg.mxu0
  %v163 = vld [vmem:[%s0 + $0x10] sm:$0xf]
  %v164 = vld [vmem:[%s0 + $0x14] sm:$0xf]
  %v165 = vld [vmem:[%s0 + $0x18] sm:$0xf]
  %v166 = vld [vmem:[%s0 + $0x1c] sm:$0xf]
  %v167 = vld [vmem:[%s1 + $0x180] sm:$0xff]
  %v168 = vld [vmem:[%s1 + $0x188] sm:$0xff]
  %v169 = vld [vmem:[%s1 + $0x190] sm:$0xff]
  %v170 = vld [vmem:[%s1 + $0x198] sm:$0xff]
  %v175 = vunpack.c.l.b16 %v163
  %v176 = vunpack.c.l.b16 %v164
  %v177 = vunpack.c.l.b16 %v165
  %v178 = vunpack.c.l.b16 %v166
  %v179 = vpack.c.b16 %v176, %v175
  %v180 = vpack.c.b16 %v178, %v177
  %183 = vmatprep.subr.bf16.mxu0 0
  %184 = vmatpush1.bf16.msra.mxu0 0
  %185 = vmatprep.subr.bf16.mxu0 0
  %186 = vmatpush1.bf16.msra.mxu0 0
  %187 = vmatprep.subr.bf16.mxu0 0
  %188 = vmatpush1.bf16.msra.mxu0 0
  %189 = vmatprep.subr.bf16.mxu0 0
  %190 = vmatpush1.bf16.msra.mxu0 0
  %191 = vmatprep.subr.bf16.mxu0 0
  %192 = vmatpush1.bf16.msra.mxu0 0
  %193 = vmatprep.subr.bf16.mxu0 0
  %194 = vmatpush1.bf16.msra.mxu0 0
  %195 = vmatprep.subr.bf16.mxu0 0
  %196 = vmatpush1.bf16.msra.mxu0 %v180
  %197 = vmatprep.subr.bf16.mxu0 0
  %198 = vmatpush1.bf16.msra.mxu0 %v179
  %199 = vmatprep.subr.bf16.mxu0 0
  %200 = vmatpush2.bf16.msra.mxu0 0
  %201 = vmatprep.subr.bf16.mxu0 0
  %202 = vmatpush2.bf16.msra.mxu0 0
  %203 = vmatprep.subr.bf16.mxu0 0
  %204 = vmatpush2.bf16.msra.mxu0 0
  %205 = vmatprep.subr.bf16.mxu0 0
  %206 = vmatpush2.bf16.msra.mxu0 0
  %207 = vmatprep.subr.bf16.mxu0 0
  %208 = vmatpush2.bf16.msra.mxu0 0
  %209 = vmatprep.subr.bf16.mxu0 0
  %210 = vmatpush2.bf16.msra.mxu0 0
  %211 = vmatprep.subr.bf16.mxu0 0
  %212 = vmatpush2.bf16.msra.mxu0 0
  %213 = vmatprep.subr.bf16.mxu0 0
  %214 = vmatpush2.bf16.msra.mxu0 0
  %215 = vmatprep.mubr.bf16.mxu0 0
  %216 = vmatmul.mubr.bf16.gmra.mxu0 %v109
  %v217 = vpop.f32.mrf.mxu0
  %v218 = vadd.f32 %v167, %v217
  %v219 = vpop.f32.mrf.mxu0
  %v220 = vpop.f32.mrf.mxu0
  %v221 = vadd.f32 %v168, %v220
  %v222 = vpop.f32.mrf.mxu0
  %223 = vmatprep.mubr.bf16.mxu0 0
  %224 = vmatmul.mubr.bf16.gmra.mxu0 %v112
  %v225 = vpop.f32.mrf.mxu0
  %v226 = vadd.f32 %v169, %v225
  %v227 = vpop.f32.mrf.mxu0
  %v228 = vpop.f32.mrf.mxu0
  %v229 = vadd.f32 %v170, %v228
  %v230 = vpop.f32.mrf.mxu0
  %231 = vdwg.mxu0
  %v232 = vld [vmem:[%s1 + $0xe0] sm:$0xff]
  %v233 = vld [vmem:[%s1 + $0xe8] sm:$0xff]
  %v234 = vld [vmem:[%s1 + $0xf0] sm:$0xff]
  %v235 = vld [vmem:[%s1 + $0xf8] sm:$0xff]
  %v236 = vld [vmem:[%s1 + $0x100] sm:$0xff]
  %v237 = vld [vmem:[%s1 + $0x108] sm:$0xff]
  %v238 = vld [vmem:[%s1 + $0x110] sm:$0xff]
  %v239 = vld [vmem:[%s1 + $0x118] sm:$0xff]
  %v240 = vld [vmem:[%s1 + $0x120] sm:$0xff]
  %v241 = vld [vmem:[%s1 + $0x128] sm:$0xff]
  %v242 = vld [vmem:[%s1 + $0x130] sm:$0xff]
  %v243 = vld [vmem:[%s1 + $0x138] sm:$0xff]
  %v244 = vld [vmem:[%s1 + $0x140] sm:$0xff]
  %v245 = vld [vmem:[%s1 + $0x148] sm:$0xff]
  %v246 = vld [vmem:[%s1 + $0x150] sm:$0xff]
  %v247 = vld [vmem:[%s1 + $0x158] sm:$0xff]
  %v248 = vmul.f32 %v149, %v232
  %v249 = vmul.f32 %v152, %v233
  %v250 = vmul.f32 %v157, %v234
  %v251 = vmul.f32 %v160, %v235
  %v252 = vmul.f32 %v149, %v236
  %v253 = vmul.f32 %v152, %v237
  %v254 = vmul.f32 %v157, %v238
  %v255 = vmul.f32 %v160, %v239
  %v256 = vmul.f32 %v149, %v240
  %v257 = vmul.f32 %v152, %v241
  %v258 = vmul.f32 %v157, %v242
  %v259 = vmul.f32 %v160, %v243
  %v260 = vmul.f32 %v149, %v244
  %v261 = vmul.f32 %v152, %v245
  %v262 = vmul.f32 %v157, %v246
  %v263 = vmul.f32 %v160, %v247
  %v264 = vpack.c.bf16 %v249, %v248
  %v265 = vpack.c.bf16 %v251, %v250
  %v266 = vpack.c.bf16 %v253, %v252
  %v267 = vpack.c.bf16 %v255, %v254
  %v268 = vpack.c.bf16 %v257, %v256
  %v269 = vpack.c.bf16 %v259, %v258
  %v270 = vpack.c.bf16 %v261, %v260
  %v271 = vpack.c.bf16 %v263, %v262
  %v272 = vpack.c.bf16 %v221, %v218
  %v273 = vpack.c.bf16 %v229, %v226
  %v274 = vld [vmem:[%s1 + $0x60] sm:$0xff]
  %v275 = vld [vmem:[%s1 + $0x68] sm:$0xff]
  %v276 = vld [vmem:[%s1 + $0x70] sm:$0xff]
  %v277 = vld [vmem:[%s1 + $0x78] sm:$0xff]
  %v278 = vld [vmem:[%s1 + $0x80] sm:$0xff]
  %v279 = vld [vmem:[%s1 + $0x88] sm:$0xff]
  %v280 = vld [vmem:[%s1 + $0x90] sm:$0xff]
  %v281 = vld [vmem:[%s1 + $0x98] sm:$0xff]
  %v282 = vld [vmem:[%s1 + $0xa0] sm:$0xff]
  %v283 = vld [vmem:[%s1 + $0xa8] sm:$0xff]
  %v284 = vld [vmem:[%s1 + $0xb0] sm:$0xff]
  %v285 = vld [vmem:[%s1 + $0xb8] sm:$0xff]
  %v286 = vld [vmem:[%s1 + $0xc0] sm:$0xff]
  %v287 = vld [vmem:[%s1 + $0xc8] sm:$0xff]
  %v288 = vld [vmem:[%s1 + $0xd0] sm:$0xff]
  %v289 = vld [vmem:[%s1 + $0xd8] sm:$0xff]
  %v291 = vsel %vm32, %v264, 0
  %v294 = vsel %vm32, %v265, 0
  %v297 = vsel %vm32, %v266, 0
  %v300 = vsel %vm32, %v267, 0
  %v303 = vsel %vm32, %v268, 0
  %v306 = vsel %vm32, %v269, 0
  %v309 = vsel %vm32, %v270, 0
  %v312 = vsel %vm32, %v271, 0
  %v315 = vsel %vm32, %v272, 0
  %v318 = vsel %vm32, %v273, 0
  %320 = vmatprep.subr.bf16.mxu0 0
  %321 = vmatpush1.bf16.xpose.msra.mxu0 0
  %322 = vmatprep.subr.bf16.mxu0 0
  %323 = vmatpush1.bf16.xpose.msra.mxu0 0
  %324 = vmatprep.subr.bf16.mxu0 0
  %325 = vmatpush1.bf16.xpose.msra.mxu0 0
  %326 = vmatprep.subr.bf16.mxu0 0
  %327 = vmatpush1.bf16.xpose.msra.mxu0 0
  %328 = vmatprep.subr.bf16.mxu0 0
  %329 = vmatpush1.bf16.xpose.msra.mxu0 0
  %330 = vmatprep.subr.bf16.mxu0 0
  %331 = vmatpush1.bf16.xpose.msra.mxu0 0
  %332 = vmatprep.subr.bf16.mxu0 0
  %333 = vmatpush1.bf16.xpose.msra.mxu0 %v318
  %334 = vmatprep.subr.bf16.mxu0 0
  %335 = vmatpush1.bf16.xpose.msra.mxu0 %v315
  %336 = vmatprep.subr.bf16.mxu0 0
  %337 = vmatpush2.bf16.xpose.msra.mxu0 0
  %338 = vmatprep.subr.bf16.mxu0 0
  %339 = vmatpush2.bf16.xpose.msra.mxu0 0
  %340 = vmatprep.subr.bf16.mxu0 0
  %341 = vmatpush2.bf16.xpose.msra.mxu0 0
  %342 = vmatprep.subr.bf16.mxu0 0
  %343 = vmatpush2.bf16.xpose.msra.mxu0 0
  %344 = vmatprep.subr.bf16.mxu0 0
  %345 = vmatpush2.bf16.xpose.msra.mxu0 0
  %346 = vmatprep.subr.bf16.mxu0 0
  %347 = vmatpush2.bf16.xpose.msra.mxu0 0
  %348 = vmatprep.subr.bf16.mxu0 0
  %349 = vmatpush2.bf16.xpose.msra.mxu0 0
  %350 = vmatprep.subr.bf16.mxu0 0
  %351 = vmatpush2.bf16.xpose.msra.mxu0 0
  %352 = vmatprep.mubr.bf16.mxu0 0
  %353 = vmatmul.mubr.bf16.gmra.mxu0 %v291
  %v354 = vpop.f32.mrf.mxu0
  %v355 = vadd.f32 %v274, %v354
  %v356 = vpop.f32.mrf.mxu0
  %v357 = vpop.f32.mrf.mxu0
  %v358 = vadd.f32 %v275, %v357
  %v359 = vpop.f32.mrf.mxu0
  %360 = vmatprep.mubr.bf16.mxu0 0
  %361 = vmatmul.mubr.bf16.gmra.mxu0 %v294
  %v362 = vpop.f32.mrf.mxu0
  %v363 = vadd.f32 %v276, %v362
  %v364 = vpop.f32.mrf.mxu0
  %v365 = vpop.f32.mrf.mxu0
  %v366 = vadd.f32 %v277, %v365
  %v367 = vpop.f32.mrf.mxu0
  %368 = vmatprep.mubr.bf16.mxu0 0
  %369 = vmatmul.mubr.bf16.gmra.mxu0 %v297
  %v370 = vpop.f32.mrf.mxu0
  %v371 = vadd.f32 %v278, %v370
  %v372 = vpop.f32.mrf.mxu0
  %v373 = vpop.f32.mrf.mxu0
  %v374 = vadd.f32 %v279, %v373
  %v375 = vpop.f32.mrf.mxu0
  %376 = vmatprep.mubr.bf16.mxu0 0
  %377 = vmatmul.mubr.bf16.gmra.mxu0 %v300
  %v378 = vpop.f32.mrf.mxu0
  %v379 = vadd.f32 %v280, %v378
  %v380 = vpop.f32.mrf.mxu0
  %v381 = vpop.f32.mrf.mxu0
  %v382 = vadd.f32 %v281, %v381
  %v383 = vpop.f32.mrf.mxu0
  %384 = vmatprep.mubr.bf16.mxu0 0
  %385 = vmatmul.mubr.bf16.gmra.mxu0 %v303
  %v386 = vpop.f32.mrf.mxu0
  %v387 = vadd.f32 %v282, %v386
  %v388 = vpop.f32.mrf.mxu0
  %v389 = vpop.f32.mrf.mxu0
  %v390 = vadd.f32 %v283, %v389
  %v391 = vpop.f32.mrf.mxu0
  %392 = vmatprep.mubr.bf16.mxu0 0
  %393 = vmatmul.mubr.bf16.gmra.mxu0 %v306
  %v394 = vpop.f32.mrf.mxu0
  %v395 = vadd.f32 %v284, %v394
  %v396 = vpop.f32.mrf.mxu0
  %v397 = vpop.f32.mrf.mxu0
  %v398 = vadd.f32 %v285, %v397
  %v399 = vpop.f32.mrf.mxu0
  %400 = vmatprep.mubr.bf16.mxu0 0
  %401 = vmatmul.mubr.bf16.gmra.mxu0 %v309
  %v402 = vpop.f32.mrf.mxu0
  %v403 = vadd.f32 %v286, %v402
  %v404 = vpop.f32.mrf.mxu0
  %v405 = vpop.f32.mrf.mxu0
  %v406 = vadd.f32 %v287, %v405
  %v407 = vpop.f32.mrf.mxu0
  %408 = vmatprep.mubr.bf16.mxu0 0
  %409 = vmatmul.mubr.bf16.gmra.mxu0 %v312
  %v410 = vpop.f32.mrf.mxu0
  %v411 = vadd.f32 %v288, %v410
  %v412 = vpop.f32.mrf.mxu0
  %v413 = vpop.f32.mrf.mxu0
  %v414 = vadd.f32 %v289, %v413
  %v415 = vpop.f32.mrf.mxu0
  %416 = vdwg.mxu0
  %v417 = vsel %vm32, %v355, -inf
  %418 = vmax.xlane.f32.xlu0 %v417
  %v419 = vpop.xlane.xlu0 %418
  %v420 = vsel %vm32, %v358, -inf
  %421 = vmax.xlane.f32.xlu0 %v420
  %v422 = vpop.xlane.xlu0 %421
  %v423 = vsel %vm32, %v363, -inf
  %424 = vmax.xlane.f32.xlu0 %v423
  %v425 = vpop.xlane.xlu0 %424
  %v426 = vsel %vm32, %v366, -inf
  %427 = vmax.xlane.f32.xlu0 %v426
  %v428 = vpop.xlane.xlu0 %427
  %v429 = vsel %vm32, %v371, -inf
  %430 = vmax.xlane.f32.xlu0 %v429
  %v431 = vpop.xlane.xlu0 %430
  %v432 = vsel %vm32, %v374, -inf
  %433 = vmax.xlane.f32.xlu0 %v432
  %v434 = vpop.xlane.xlu0 %433
  %v435 = vsel %vm32, %v379, -inf
  %436 = vmax.xlane.f32.xlu0 %v435
  %v437 = vpop.xlane.xlu0 %436
  %v438 = vsel %vm32, %v382, -inf
  %439 = vmax.xlane.f32.xlu0 %v438
  %v440 = vpop.xlane.xlu0 %439
  %v441 = vsel %vm32, %v387, -inf
  %442 = vmax.xlane.f32.xlu0 %v441
  %v443 = vpop.xlane.xlu0 %442
  %v444 = vsel %vm32, %v390, -inf
  %445 = vmax.xlane.f32.xlu0 %v444
  %v446 = vpop.xlane.xlu0 %445
  %v447 = vsel %vm32, %v395, -inf
  %448 = vmax.xlane.f32.xlu0 %v447
  %v449 = vpop.xlane.xlu0 %448
  %v450 = vsel %vm32, %v398, -inf
  %451 = vmax.xlane.f32.xlu0 %v450
  %v452 = vpop.xlane.xlu0 %451
  %v453 = vsel %vm32, %v403, -inf
  %454 = vmax.xlane.f32.xlu0 %v453
  %v455 = vpop.xlane.xlu0 %454
  %v456 = vsel %vm32, %v406, -inf
  %457 = vmax.xlane.f32.xlu0 %v456
  %v458 = vpop.xlane.xlu0 %457
  %v459 = vsel %vm32, %v411, -inf
  %460 = vmax.xlane.f32.xlu0 %v459
  %v461 = vpop.xlane.xlu0 %460
  %v462 = vsel %vm32, %v414, -inf
  %463 = vmax.xlane.f32.xlu0 %v462
  %v464 = vpop.xlane.xlu0 %463
  %v465 = vsub.f32 %v355, %v419
  %v466 = vsub.f32 %v358, %v422
  %v467 = vsub.f32 %v363, %v425
  %v468 = vsub.f32 %v366, %v428
  %v469 = vsub.f32 %v371, %v431
  %v470 = vsub.f32 %v374, %v434
  %v471 = vsub.f32 %v379, %v437
  %v472 = vsub.f32 %v382, %v440
  %v473 = vsub.f32 %v387, %v443
  %v474 = vsub.f32 %v390, %v446
  %v475 = vsub.f32 %v395, %v449
  %v476 = vsub.f32 %v398, %v452
  %v477 = vsub.f32 %v403, %v455
  %v478 = vsub.f32 %v406, %v458
  %v479 = vsub.f32 %v411, %v461
  %v480 = vsub.f32 %v414, %v464
  %v481 = vmul.f32 %v465, 1.442695
  %v482 = vpow.pop %v481
  %v483 = vmul.f32 %v466, 1.442695
  %v484 = vpow.pop %v483
  %v485 = vmul.f32 %v467, 1.442695
  %v486 = vpow.pop %v485
  %v487 = vmul.f32 %v468, 1.442695
  %v488 = vpow.pop %v487
  %v489 = vmul.f32 %v469, 1.442695
  %v490 = vpow.pop %v489
  %v491 = vmul.f32 %v470, 1.442695
  %v492 = vpow.pop %v491
  %v493 = vmul.f32 %v471, 1.442695
  %v494 = vpow.pop %v493
  %v495 = vmul.f32 %v472, 1.442695
  %v496 = vpow.pop %v495
  %v497 = vmul.f32 %v473, 1.442695
  %v498 = vpow.pop %v497
  %v499 = vmul.f32 %v474, 1.442695
  %v500 = vpow.pop %v499
  %v501 = vmul.f32 %v475, 1.442695
  %v502 = vpow.pop %v501
  %v503 = vmul.f32 %v476, 1.442695
  %v504 = vpow.pop %v503
  %v505 = vmul.f32 %v477, 1.442695
  %v506 = vpow.pop %v505
  %v507 = vmul.f32 %v478, 1.442695
  %v508 = vpow.pop %v507
  %v509 = vmul.f32 %v479, 1.442695
  %v510 = vpow.pop %v509
  %v511 = vmul.f32 %v480, 1.442695
  %v512 = vpow.pop %v511
  %v513 = vsel %vm32, %v482, 0.0
  %514 = vadd.xlane.f32.xlu0 %v513
  %v515 = vpop.xlane.xlu0 %514
  %v516 = vsel %vm32, %v484, 0.0
  %517 = vadd.xlane.f32.xlu0 %v516
  %v518 = vpop.xlane.xlu0 %517
  %v519 = vsel %vm32, %v486, 0.0
  %520 = vadd.xlane.f32.xlu0 %v519
  %v521 = vpop.xlane.xlu0 %520
  %v522 = vsel %vm32, %v488, 0.0
  %523 = vadd.xlane.f32.xlu0 %v522
  %v524 = vpop.xlane.xlu0 %523
  %v525 = vsel %vm32, %v490, 0.0
  %526 = vadd.xlane.f32.xlu0 %v525
  %v527 = vpop.xlane.xlu0 %526
  %v528 = vsel %vm32, %v492, 0.0
  %529 = vadd.xlane.f32.xlu0 %v528
  %v530 = vpop.xlane.xlu0 %529
  %v531 = vsel %vm32, %v494, 0.0
  %532 = vadd.xlane.f32.xlu0 %v531
  %v533 = vpop.xlane.xlu0 %532
  %v534 = vsel %vm32, %v496, 0.0
  %535 = vadd.xlane.f32.xlu0 %v534
  %v536 = vpop.xlane.xlu0 %535
  %v537 = vsel %vm32, %v498, 0.0
  %538 = vadd.xlane.f32.xlu0 %v537
  %v539 = vpop.xlane.xlu0 %538
  %v540 = vsel %vm32, %v500, 0.0
  %541 = vadd.xlane.f32.xlu0 %v540
  %v542 = vpop.xlane.xlu0 %541
  %v543 = vsel %vm32, %v502, 0.0
  %544 = vadd.xlane.f32.xlu0 %v543
  %v545 = vpop.xlane.xlu0 %544
  %v546 = vsel %vm32, %v504, 0.0
  %547 = vadd.xlane.f32.xlu0 %v546
  %v548 = vpop.xlane.xlu0 %547
  %v549 = vsel %vm32, %v506, 0.0
  %550 = vadd.xlane.f32.xlu0 %v549
  %v551 = vpop.xlane.xlu0 %550
  %v552 = vsel %vm32, %v508, 0.0
  %553 = vadd.xlane.f32.xlu0 %v552
  %v554 = vpop.xlane.xlu0 %553
  %v555 = vsel %vm32, %v510, 0.0
  %556 = vadd.xlane.f32.xlu0 %v555
  %v557 = vpop.xlane.xlu0 %556
  %v558 = vsel %vm32, %v512, 0.0
  %559 = vadd.xlane.f32.xlu0 %v558
  %v560 = vpop.xlane.xlu0 %559
  %v561 = vrcp.pop %v515
  %v562 = vrcp.pop %v518
  %v563 = vrcp.pop %v521
  %v564 = vrcp.pop %v524
  %v565 = vrcp.pop %v527
  %v566 = vrcp.pop %v530
  %v567 = vrcp.pop %v533
  %v568 = vrcp.pop %v536
  %v569 = vrcp.pop %v539
  %v570 = vrcp.pop %v542
  %v571 = vrcp.pop %v545
  %v572 = vrcp.pop %v548
  %v573 = vrcp.pop %v551
  %v574 = vrcp.pop %v554
  %v575 = vrcp.pop %v557
  %v576 = vrcp.pop %v560
  %v577 = vmul.f32 %v482, %v561
  %v578 = vmul.f32 %v484, %v562
  %v579 = vmul.f32 %v486, %v563
  %v580 = vmul.f32 %v488, %v564
  %v581 = vmul.f32 %v490, %v565
  %v582 = vmul.f32 %v492, %v566
  %v583 = vmul.f32 %v494, %v567
  %v584 = vmul.f32 %v496, %v568
  %v585 = vmul.f32 %v498, %v569
  %v586 = vmul.f32 %v500, %v570
  %v587 = vmul.f32 %v502, %v571
  %v588 = vmul.f32 %v504, %v572
  %v589 = vmul.f32 %v506, %v573
  %v590 = vmul.f32 %v508, %v574
  %v591 = vmul.f32 %v510, %v575
  %v592 = vmul.f32 %v512, %v576
  %v593 = vpack.c.bf16 %v578, %v577
  %v594 = vpack.c.bf16 %v580, %v579
  %v595 = vpack.c.bf16 %v582, %v581
  %v596 = vpack.c.bf16 %v584, %v583
  %v597 = vpack.c.bf16 %v586, %v585
  %v598 = vpack.c.bf16 %v588, %v587
  %v599 = vpack.c.bf16 %v590, %v589
  %v600 = vpack.c.bf16 %v592, %v591
  %v602 = vsel %vm32, %v593, 0
  %v605 = vsel %vm32, %v594, 0
  %v608 = vsel %vm32, %v595, 0
  %v611 = vsel %vm32, %v596, 0
  %v614 = vsel %vm32, %v597, 0
  %v617 = vsel %vm32, %v598, 0
  %v620 = vsel %vm32, %v599, 0
  %v623 = vsel %vm32, %v600, 0
  %625 = vmatprep.subr.bf16.mxu0 0
  %626 = vmatpush1.bf16.msra.mxu0 0
  %627 = vmatprep.subr.bf16.mxu0 0
  %628 = vmatpush1.bf16.msra.mxu0 0
  %629 = vmatprep.subr.bf16.mxu0 0
  %630 = vmatpush1.bf16.msra.mxu0 0
  %631 = vmatprep.subr.bf16.mxu0 0
  %632 = vmatpush1.bf16.msra.mxu0 0
  %633 = vmatprep.subr.bf16.mxu0 0
  %634 = vmatpush1.bf16.msra.mxu0 0
  %635 = vmatprep.subr.bf16.mxu0 0
  %636 = vmatpush1.bf16.msra.mxu0 0
  %637 = vmatprep.subr.bf16.mxu0 0
  %638 = vmatpush1.bf16.msra.mxu0 %v87
  %639 = vmatprep.subr.bf16.mxu0 0
  %640 = vmatpush1.bf16.msra.mxu0 %v86
  %641 = vmatprep.subr.bf16.mxu0 0
  %642 = vmatpush2.bf16.msra.mxu0 0
  %643 = vmatprep.subr.bf16.mxu0 0
  %644 = vmatpush2.bf16.msra.mxu0 0
  %645 = vmatprep.subr.bf16.mxu0 0
  %646 = vmatpush2.bf16.msra.mxu0 0
  %647 = vmatprep.subr.bf16.mxu0 0
  %648 = vmatpush2.bf16.msra.mxu0 0
  %649 = vmatprep.subr.bf16.mxu0 0
  %650 = vmatpush2.bf16.msra.mxu0 0
  %651 = vmatprep.subr.bf16.mxu0 0
  %652 = vmatpush2.bf16.msra.mxu0 0
  %653 = vmatprep.subr.bf16.mxu0 0
  %654 = vmatpush2.bf16.msra.mxu0 0
  %655 = vmatprep.subr.bf16.mxu0 0
  %656 = vmatpush2.bf16.msra.mxu0 0
  %657 = vmatprep.mubr.bf16.mxu0 0
  %658 = vmatmul.mubr.bf16.gmra.mxu0 %v602
  %v659 = vpop.f32.mrf.mxu0
  %v660 = vadd.f32 0.0, %v659
  %v661 = vpop.f32.mrf.mxu0
  %v662 = vpop.f32.mrf.mxu0
  %v663 = vadd.f32 0.0, %v662
  %v664 = vpop.f32.mrf.mxu0
  %665 = vmatprep.mubr.bf16.mxu0 0
  %666 = vmatmul.mubr.bf16.gmra.mxu0 %v605
  %v667 = vpop.f32.mrf.mxu0
  %v668 = vadd.f32 0.0, %v667
  %v669 = vpop.f32.mrf.mxu0
  %v670 = vpop.f32.mrf.mxu0
  %v671 = vadd.f32 0.0, %v670
  %v672 = vpop.f32.mrf.mxu0
  %673 = vmatprep.mubr.bf16.mxu0 0
  %674 = vmatmul.mubr.bf16.gmra.mxu0 %v608
  %v675 = vpop.f32.mrf.mxu0
  %v676 = vadd.f32 0.0, %v675
  %v677 = vpop.f32.mrf.mxu0
  %v678 = vpop.f32.mrf.mxu0
  %v679 = vadd.f32 0.0, %v678
  %v680 = vpop.f32.mrf.mxu0
  %681 = vmatprep.mubr.bf16.mxu0 0
  %682 = vmatmul.mubr.bf16.gmra.mxu0 %v611
  %v683 = vpop.f32.mrf.mxu0
  %v684 = vadd.f32 0.0, %v683
  %v685 = vpop.f32.mrf.mxu0
  %v686 = vpop.f32.mrf.mxu0
  %v687 = vadd.f32 0.0, %v686
  %v688 = vpop.f32.mrf.mxu0
  %689 = vmatprep.mubr.bf16.mxu0 0
  %690 = vmatmul.mubr.bf16.gmra.mxu0 %v614
  %v691 = vpop.f32.mrf.mxu0
  %v692 = vadd.f32 0.0, %v691
  %v693 = vpop.f32.mrf.mxu0
  %v694 = vpop.f32.mrf.mxu0
  %v695 = vadd.f32 0.0, %v694
  %v696 = vpop.f32.mrf.mxu0
  %697 = vmatprep.mubr.bf16.mxu0 0
  %698 = vmatmul.mubr.bf16.gmra.mxu0 %v617
  %v699 = vpop.f32.mrf.mxu0
  %v700 = vadd.f32 0.0, %v699
  %v701 = vpop.f32.mrf.mxu0
  %v702 = vpop.f32.mrf.mxu0
  %v703 = vadd.f32 0.0, %v702
  %v704 = vpop.f32.mrf.mxu0
  %705 = vmatprep.mubr.bf16.mxu0 0
  %706 = vmatmul.mubr.bf16.gmra.mxu0 %v620
  %v707 = vpop.f32.mrf.mxu0
  %v708 = vadd.f32 0.0, %v707
  %v709 = vpop.f32.mrf.mxu0
  %v710 = vpop.f32.mrf.mxu0
  %v711 = vadd.f32 0.0, %v710
  %v712 = vpop.f32.mrf.mxu0
  %713 = vmatprep.mubr.bf16.mxu0 0
  %714 = vmatmul.mubr.bf16.gmra.mxu0 %v623
  %v715 = vpop.f32.mrf.mxu0
  %v716 = vadd.f32 0.0, %v715
  %v717 = vpop.f32.mrf.mxu0
  %v718 = vpop.f32.mrf.mxu0
  %v719 = vadd.f32 0.0, %v718
  %v720 = vpop.f32.mrf.mxu0
  %721 = vdwg.mxu0
  %v722 = vld [vmem:[%s1 + $0x1a0] sm:$0xff]
  %v723 = vld [vmem:[%s1 + $0x1a8] sm:$0xff]
  %v724 = vld [vmem:[%s1 + $0x1b0] sm:$0xff]
  %v725 = vld [vmem:[%s1 + $0x1b8] sm:$0xff]
  %v726 = vpack.c.bf16 %v663, %v660
  %v727 = vpack.c.bf16 %v671, %v668
  %v728 = vld [vmem:[%s0 + $0x20] sm:$0xf]
  %v729 = vld [vmem:[%s0 + $0x24] sm:$0xf]
  %v730 = vld [vmem:[%s0 + $0x28] sm:$0xf]
  %v731 = vld [vmem:[%s0 + $0x2c] sm:$0xf]
  %v736 = vunpack.c.l.b16 %v728
  %v737 = vunpack.c.l.b16 %v729
  %v738 = vunpack.c.l.b16 %v730
  %v739 = vunpack.c.l.b16 %v731
  %v740 = vpack.c.b16 %v737, %v736
  %v741 = vpack.c.b16 %v739, %v738
  %v745 = vsel %vm32, %v726, 0
  %v748 = vsel %vm32, %v727, 0
  %750 = vmatprep.subr.bf16.mxu0 0
  %751 = vmatpush1.bf16.msra.mxu0 0
  %752 = vmatprep.subr.bf16.mxu0 0
  %753 = vmatpush1.bf16.msra.mxu0 0
  %754 = vmatprep.subr.bf16.mxu0 0
  %755 = vmatpush1.bf16.msra.mxu0 0
  %756 = vmatprep.subr.bf16.mxu0 0
  %757 = vmatpush1.bf16.msra.mxu0 0
  %758 = vmatprep.subr.bf16.mxu0 0
  %759 = vmatpush1.bf16.msra.mxu0 0
  %760 = vmatprep.subr.bf16.mxu0 0
  %761 = vmatpush1.bf16.msra.mxu0 0
  %762 = vmatprep.subr.bf16.mxu0 0
  %763 = vmatpush1.bf16.msra.mxu0 %v741
  %764 = vmatprep.subr.bf16.mxu0 0
  %765 = vmatpush1.bf16.msra.mxu0 %v740
  %766 = vmatprep.subr.bf16.mxu0 0
  %767 = vmatpush2.bf16.msra.mxu0 0
  %768 = vmatprep.subr.bf16.mxu0 0
  %769 = vmatpush2.bf16.msra.mxu0 0
  %770 = vmatprep.subr.bf16.mxu0 0
  %771 = vmatpush2.bf16.msra.mxu0 0
  %772 = vmatprep.subr.bf16.mxu0 0
  %773 = vmatpush2.bf16.msra.mxu0 0
  %774 = vmatprep.subr.bf16.mxu0 0
  %775 = vmatpush2.bf16.msra.mxu0 0
  %776 = vmatprep.subr.bf16.mxu0 0
  %777 = vmatpush2.bf16.msra.mxu0 0
  %778 = vmatprep.subr.bf16.mxu0 0
  %779 = vmatpush2.bf16.msra.mxu0 0
  %780 = vmatprep.subr.bf16.mxu0 0
  %781 = vmatpush2.bf16.msra.mxu0 0
  %782 = vmatprep.mubr.bf16.mxu0 0
  %783 = vmatmul.mubr.bf16.gmra.mxu0 %v745
  %v784 = vpop.f32.mrf.mxu0
  %v785 = vadd.f32 0.0, %v784
  %v786 = vpop.f32.mrf.mxu0
  %v787 = vpop.f32.mrf.mxu0
  %v788 = vadd.f32 0.0, %v787
  %v789 = vpop.f32.mrf.mxu0
  %790 = vmatprep.mubr.bf16.mxu0 0
  %791 = vmatmul.mubr.bf16.gmra.mxu0 %v748
  %v792 = vpop.f32.mrf.mxu0
  %v793 = vadd.f32 0.0, %v792
  %v794 = vpop.f32.mrf.mxu0
  %v795 = vpop.f32.mrf.mxu0
  %v796 = vadd.f32 0.0, %v795
  %v797 = vpop.f32.mrf.mxu0
  %798 = vdwg.mxu0
  %v799 = vadd.f32 %v722, %v785
  %v800 = vadd.f32 %v723, %v788
  %v801 = vadd.f32 %v724, %v793
  %v802 = vadd.f32 %v725, %v796
  %v803 = vpack.c.bf16 %v679, %v676
  %v804 = vpack.c.bf16 %v687, %v684
  %v805 = vld [vmem:[%s0 + $0x30] sm:$0xf]
  %v806 = vld [vmem:[%s0 + $0x34] sm:$0xf]
  %v807 = vld [vmem:[%s0 + $0x38] sm:$0xf]
  %v808 = vld [vmem:[%s0 + $0x3c] sm:$0xf]
  %v813 = vunpack.c.l.b16 %v805
  %v814 = vunpack.c.l.b16 %v806
  %v815 = vunpack.c.l.b16 %v807
  %v816 = vunpack.c.l.b16 %v808
  %v817 = vpack.c.b16 %v814, %v813
  %v818 = vpack.c.b16 %v816, %v815
  %v822 = vsel %vm32, %v803, 0
  %v825 = vsel %vm32, %v804, 0
  %827 = vmatprep.subr.bf16.mxu0 0
  %828 = vmatpush1.bf16.msra.mxu0 0
  %829 = vmatprep.subr.bf16.mxu0 0
  %830 = vmatpush1.bf16.msra.mxu0 0
  %831 = vmatprep.subr.bf16.mxu0 0
  %832 = vmatpush1.bf16.msra.mxu0 0
  %833 = vmatprep.subr.bf16.mxu0 0
  %834 = vmatpush1.bf16.msra.mxu0 0
  %835 = vmatprep.subr.bf16.mxu0 0
  %836 = vmatpush1.bf16.msra.mxu0 0
  %837 = vmatprep.subr.bf16.mxu0 0
  %838 = vmatpush1.bf16.msra.mxu0 0
  %839 = vmatprep.subr.bf16.mxu0 0
  %840 = vmatpush1.bf16.msra.mxu0 %v818
  %841 = vmatprep.subr.bf16.mxu0 0
  %842 = vmatpush1.bf16.msra.mxu0 %v817
  %843 = vmatprep.subr.bf16.mxu0 0
  %844 = vmatpush2.bf16.msra.mxu0 0
  %845 = vmatprep.subr.bf16.mxu0 0
  %846 = vmatpush2.bf16.msra.mxu0 0
  %847 = vmatprep.subr.bf16.mxu0 0
  %848 = vmatpush2.bf16.msra.mxu0 0
  %849 = vmatprep.subr.bf16.mxu0 0
  %850 = vmatpush2.bf16.msra.mxu0 0
  %851 = vmatprep.subr.bf16.mxu0 0
  %852 = vmatpush2.bf16.msra.mxu0 0
  %853 = vmatprep.subr.bf16.mxu0 0
  %854 = vmatpush2.bf16.msra.mxu0 0
  %855 = vmatprep.subr.bf16.mxu0 0
  %856 = vmatpush2.bf16.msra.mxu0 0
  %857 = vmatprep.subr.bf16.mxu0 0
  %858 = vmatpush2.bf16.msra.mxu0 0
  %859 = vmatprep.mubr.bf16.mxu0 0
  %860 = vmatmul.mubr.bf16.gmra.mxu0 %v822
  %v861 = vpop.f32.mrf.mxu0
  %v862 = vadd.f32 0.0, %v861
  %v863 = vpop.f32.mrf.mxu0
  %v864 = vpop.f32.mrf.mxu0
  %v865 = vadd.f32 0.0, %v864
  %v866 = vpop.f32.mrf.mxu0
  %867 = vmatprep.mubr.bf16.mxu0 0
  %868 = vmatmul.mubr.bf16.gmra.mxu0 %v825
  %v869 = vpop.f32.mrf.mxu0
  %v870 = vadd.f32 0.0, %v869
  %v871 = vpop.f32.mrf.mxu0
  %v872 = vpop.f32.mrf.mxu0
  %v873 = vadd.f32 0.0, %v872
  %v874 = vpop.f32.mrf.mxu0
  %875 = vdwg.mxu0
  %v876 = vadd.f32 %v799, %v862
  %v877 = vadd.f32 %v800, %v865
  %v878 = vadd.f32 %v801, %v870
  %v879 = vadd.f32 %v802, %v873
  %v880 = vpack.c.bf16 %v695, %v692
  %v881 = vpack.c.bf16 %v703, %v700
  %v882 = vld [vmem:[%s0 + $0x40] sm:$0xf]
  %v883 = vld [vmem:[%s0 + $0x44] sm:$0xf]
  %v884 = vld [vmem:[%s0 + $0x48] sm:$0xf]
  %v885 = vld [vmem:[%s0 + $0x4c] sm:$0xf]
  %v890 = vunpack.c.l.b16 %v882
  %v891 = vunpack.c.l.b16 %v883
  %v892 = vunpack.c.l.b16 %v884
  %v893 = vunpack.c.l.b16 %v885
  %v894 = vpack.c.b16 %v891, %v890
  %v895 = vpack.c.b16 %v893, %v892
  %v899 = vsel %vm32, %v880, 0
  %v902 = vsel %vm32, %v881, 0
  %904 = vmatprep.subr.bf16.mxu0 0
  %905 = vmatpush1.bf16.msra.mxu0 0
  %906 = vmatprep.subr.bf16.mxu0 0
  %907 = vmatpush1.bf16.msra.mxu0 0
  %908 = vmatprep.subr.bf16.mxu0 0
  %909 = vmatpush1.bf16.msra.mxu0 0
  %910 = vmatprep.subr.bf16.mxu0 0
  %911 = vmatpush1.bf16.msra.mxu0 0
  %912 = vmatprep.subr.bf16.mxu0 0
  %913 = vmatpush1.bf16.msra.mxu0 0
  %914 = vmatprep.subr.bf16.mxu0 0
  %915 = vmatpush1.bf16.msra.mxu0 0
  %916 = vmatprep.subr.bf16.mxu0 0
  %917 = vmatpush1.bf16.msra.mxu0 %v895
  %918 = vmatprep.subr.bf16.mxu0 0
  %919 = vmatpush1.bf16.msra.mxu0 %v894
  %920 = vmatprep.subr.bf16.mxu0 0
  %921 = vmatpush2.bf16.msra.mxu0 0
  %922 = vmatprep.subr.bf16.mxu0 0
  %923 = vmatpush2.bf16.msra.mxu0 0
  %924 = vmatprep.subr.bf16.mxu0 0
  %925 = vmatpush2.bf16.msra.mxu0 0
  %926 = vmatprep.subr.bf16.mxu0 0
  %927 = vmatpush2.bf16.msra.mxu0 0
  %928 = vmatprep.subr.bf16.mxu0 0
  %929 = vmatpush2.bf16.msra.mxu0 0
  %930 = vmatprep.subr.bf16.mxu0 0
  %931 = vmatpush2.bf16.msra.mxu0 0
  %932 = vmatprep.subr.bf16.mxu0 0
  %933 = vmatpush2.bf16.msra.mxu0 0
  %934 = vmatprep.subr.bf16.mxu0 0
  %935 = vmatpush2.bf16.msra.mxu0 0
  %936 = vmatprep.mubr.bf16.mxu0 0
  %937 = vmatmul.mubr.bf16.gmra.mxu0 %v899
  %v938 = vpop.f32.mrf.mxu0
  %v939 = vadd.f32 0.0, %v938
  %v940 = vpop.f32.mrf.mxu0
  %v941 = vpop.f32.mrf.mxu0
  %v942 = vadd.f32 0.0, %v941
  %v943 = vpop.f32.mrf.mxu0
  %944 = vmatprep.mubr.bf16.mxu0 0
  %945 = vmatmul.mubr.bf16.gmra.mxu0 %v902
  %v946 = vpop.f32.mrf.mxu0
  %v947 = vadd.f32 0.0, %v946
  %v948 = vpop.f32.mrf.mxu0
  %v949 = vpop.f32.mrf.mxu0
  %v950 = vadd.f32 0.0, %v949
  %v951 = vpop.f32.mrf.mxu0
  %952 = vdwg.mxu0
  %v953 = vadd.f32 %v876, %v939
  %v954 = vadd.f32 %v877, %v942
  %v955 = vadd.f32 %v878, %v947
  %v956 = vadd.f32 %v879, %v950
  %v957 = vpack.c.bf16 %v711, %v708
  %v958 = vpack.c.bf16 %v719, %v716
  %v959 = vld [vmem:[%s0 + $0x50] sm:$0xf]
  %v960 = vld [vmem:[%s0 + $0x54] sm:$0xf]
  %v961 = vld [vmem:[%s0 + $0x58] sm:$0xf]
  %v962 = vld [vmem:[%s0 + $0x5c] sm:$0xf]
  %v967 = vunpack.c.l.b16 %v959
  %v968 = vunpack.c.l.b16 %v960
  %v969 = vunpack.c.l.b16 %v961
  %v970 = vunpack.c.l.b16 %v962
  %v971 = vpack.c.b16 %v968, %v967
  %v972 = vpack.c.b16 %v970, %v969
  %v976 = vsel %vm32, %v957, 0
  %v979 = vsel %vm32, %v958, 0
  %981 = vmatprep.subr.bf16.mxu0 0
  %982 = vmatpush1.bf16.msra.mxu0 0
  %983 = vmatprep.subr.bf16.mxu0 0
  %984 = vmatpush1.bf16.msra.mxu0 0
  %985 = vmatprep.subr.bf16.mxu0 0
  %986 = vmatpush1.bf16.msra.mxu0 0
  %987 = vmatprep.subr.bf16.mxu0 0
  %988 = vmatpush1.bf16.msra.mxu0 0
  %989 = vmatprep.subr.bf16.mxu0 0
  %990 = vmatpush1.bf16.msra.mxu0 0
  %991 = vmatprep.subr.bf16.mxu0 0
  %992 = vmatpush1.bf16.msra.mxu0 0
  %993 = vmatprep.subr.bf16.mxu0 0
  %994 = vmatpush1.bf16.msra.mxu0 %v972
  %995 = vmatprep.subr.bf16.mxu0 0
  %996 = vmatpush1.bf16.msra.mxu0 %v971
  %997 = vmatprep.subr.bf16.mxu0 0
  %998 = vmatpush2.bf16.msra.mxu0 0
  %999 = vmatprep.subr.bf16.mxu0 0
  %1000 = vmatpush2.bf16.msra.mxu0 0
  %1001 = vmatprep.subr.bf16.mxu0 0
  %1002 = vmatpush2.bf16.msra.mxu0 0
  %1003 = vmatprep.subr.bf16.mxu0 0
  %1004 = vmatpush2.bf16.msra.mxu0 0
  %1005 = vmatprep.subr.bf16.mxu0 0
  %1006 = vmatpush2.bf16.msra.mxu0 0
  %1007 = vmatprep.subr.bf16.mxu0 0
  %1008 = vmatpush2.bf16.msra.mxu0 0
  %1009 = vmatprep.subr.bf16.mxu0 0
  %1010 = vmatpush2.bf16.msra.mxu0 0
  %1011 = vmatprep.subr.bf16.mxu0 0
  %1012 = vmatpush2.bf16.msra.mxu0 0
  %1013 = vmatprep.mubr.bf16.mxu0 0
  %1014 = vmatmul.mubr.bf16.gmra.mxu0 %v976
  %v1015 = vpop.f32.mrf.mxu0
  %v1016 = vadd.f32 0.0, %v1015
  %v1017 = vpop.f32.mrf.mxu0
  %v1018 = vpop.f32.mrf.mxu0
  %v1019 = vadd.f32 0.0, %v1018
  %v1020 = vpop.f32.mrf.mxu0
  %1021 = vmatprep.mubr.bf16.mxu0 0
  %1022 = vmatmul.mubr.bf16.gmra.mxu0 %v979
  %v1023 = vpop.f32.mrf.mxu0
  %v1024 = vadd.f32 0.0, %v1023
  %v1025 = vpop.f32.mrf.mxu0
  %v1026 = vpop.f32.mrf.mxu0
  %v1027 = vadd.f32 0.0, %v1026
  %v1028 = vpop.f32.mrf.mxu0
  %1029 = vdwg.mxu0
  %v1030 = vadd.f32 %v953, %v1016
  %v1031 = vadd.f32 %v954, %v1019
  %v1032 = vadd.f32 %v955, %v1024
  %v1033 = vadd.f32 %v956, %v1027
  %v1034 = vadd.f32 %v28, %v1030
  %v1035 = vadd.f32 %v29, %v1031
  %v1036 = vadd.f32 %v30, %v1032
  %v1037 = vadd.f32 %v31, %v1033
  %v1038 = vsel %vm32, %v1034, 0.0
  %1039 = vadd.xlane.f32.xlu0 %v1038
  %v1040 = vpop.xlane.xlu0 %1039
  %v1041 = vsel %vm32, %v1035, 0.0
  %1042 = vadd.xlane.f32.xlu0 %v1041
  %v1043 = vpop.xlane.xlu0 %1042
  %v1044 = vsel %vm32, %v1036, 0.0
  %1045 = vadd.xlane.f32.xlu0 %v1044
  %v1046 = vpop.xlane.xlu0 %1045
  %v1047 = vsel %vm32, %v1037, 0.0
  %1048 = vadd.xlane.f32.xlu0 %v1047
  %v1049 = vpop.xlane.xlu0 %1048
  %v1050 = vmul.f32 %v1040, %v45
  %v1051 = vmul.f32 %v1043, %v45
  %v1052 = vmul.f32 %v1046, %v45
  %v1053 = vmul.f32 %v1049, %v45
  %v1054 = vsub.f32 %v1034, %v1050
  %v1055 = vsub.f32 %v1035, %v1051
  %v1056 = vsub.f32 %v1036, %v1052
  %v1057 = vsub.f32 %v1037, %v1053
  %v1058 = vmul.f32 %v1054, %v1054
  %v1059 = vmul.f32 %v1055, %v1055
  %v1060 = vmul.f32 %v1056, %v1056
  %v1061 = vmul.f32 %v1057, %v1057
  %v1062 = vsel %vm32, %v1058, 0.0
  %1063 = vadd.xlane.f32.xlu0 %v1062
  %v1064 = vpop.xlane.xlu0 %1063
  %v1065 = vsel %vm32, %v1059, 0.0
  %1066 = vadd.xlane.f32.xlu0 %v1065
  %v1067 = vpop.xlane.xlu0 %1066
  %v1068 = vsel %vm32, %v1060, 0.0
  %1069 = vadd.xlane.f32.xlu0 %v1068
  %v1070 = vpop.xlane.xlu0 %1069
  %v1071 = vsel %vm32, %v1061, 0.0
  %1072 = vadd.xlane.f32.xlu0 %v1071
  %v1073 = vpop.xlane.xlu0 %1072
  %v1074 = vmul.f32 %v1064, %v45
  %v1075 = vmul.f32 %v1067, %v45
  %v1076 = vmul.f32 %v1070, %v45
  %v1077 = vmul.f32 %v1073, %v45
  %v1078 = vadd.f32 %v1074, 1e-05
  %v1079 = vadd.f32 %v1075, 1e-05
  %v1080 = vadd.f32 %v1076, 1e-05
  %v1081 = vadd.f32 %v1077, 1e-05
  %v1082 = vrsqrt.pop %v1078
  %v1083 = vrsqrt.pop %v1079
  %v1084 = vrsqrt.pop %v1080
  %v1085 = vrsqrt.pop %v1081
  %v1086 = vmul.f32 %v1054, %v1082
  %v1087 = vmul.f32 %v1055, %v1083
  %v1088 = vmul.f32 %v1056, %v1084
  %v1089 = vmul.f32 %v1057, %v1085
  %v1090 = vpack.c.bf16 %v1087, %v1086
  %v1091 = vpack.c.bf16 %v1089, %v1088
  %v1092 = vld [vmem:[%s0 + $0x60] sm:$0xf]
  %v1093 = vld [vmem:[%s0 + $0x64] sm:$0xf]
  %v1094 = vld [vmem:[%s0 + $0x68] sm:$0xf]
  %v1095 = vld [vmem:[%s0 + $0x6c] sm:$0xf]
  %v1096 = vld [vmem:[%s1 + $0x1c0] sm:$0xff]
  %v1097 = vld [vmem:[%s1 + $0x1c8] sm:$0xff]
  %v1098 = vld [vmem:[%s1 + $0x1d0] sm:$0xff]
  %v1099 = vld [vmem:[%s1 + $0x1d8] sm:$0xff]
  %v1104 = vunpack.c.l.b16 %v1092
  %v1105 = vunpack.c.l.b16 %v1093
  %v1106 = vunpack.c.l.b16 %v1094
  %v1107 = vunpack.c.l.b16 %v1095
  %v1108 = vpack.c.b16 %v1105, %v1104
  %v1109 = vpack.c.b16 %v1107, %v1106
  %v1113 = vsel %vm32, %v1090, 0
  %v1116 = vsel %vm32, %v1091, 0
  %1118 = vmatprep.subr.bf16.mxu0 0
  %1119 = vmatpush1.bf16.msra.mxu0 0
  %1120 = vmatprep.subr.bf16.mxu0 0
  %1121 = vmatpush1.bf16.msra.mxu0 0
  %1122 = vmatprep.subr.bf16.mxu0 0
  %1123 = vmatpush1.bf16.msra.mxu0 0
  %1124 = vmatprep.subr.bf16.mxu0 0
  %1125 = vmatpush1.bf16.msra.mxu0 0
  %1126 = vmatprep.subr.bf16.mxu0 0
  %1127 = vmatpush1.bf16.msra.mxu0 0
  %1128 = vmatprep.subr.bf16.mxu0 0
  %1129 = vmatpush1.bf16.msra.mxu0 0
  %1130 = vmatprep.subr.bf16.mxu0 0
  %1131 = vmatpush1.bf16.msra.mxu0 %v1109
  %1132 = vmatprep.subr.bf16.mxu0 0
  %1133 = vmatpush1.bf16.msra.mxu0 %v1108
  %1134 = vmatprep.subr.bf16.mxu0 0
  %1135 = vmatpush2.bf16.msra.mxu0 0
  %1136 = vmatprep.subr.bf16.mxu0 0
  %1137 = vmatpush2.bf16.msra.mxu0 0
  %1138 = vmatprep.subr.bf16.mxu0 0
  %1139 = vmatpush2.bf16.msra.mxu0 0
  %1140 = vmatprep.subr.bf16.mxu0 0
  %1141 = vmatpush2.bf16.msra.mxu0 0
  %1142 = vmatprep.subr.bf16.mxu0 0
  %1143 = vmatpush2.bf16.msra.mxu0 0
  %1144 = vmatprep.subr.bf16.mxu0 0
  %1145 = vmatpush2.bf16.msra.mxu0 0
  %1146 = vmatprep.subr.bf16.mxu0 0
  %1147 = vmatpush2.bf16.msra.mxu0 0
  %1148 = vmatprep.subr.bf16.mxu0 0
  %1149 = vmatpush2.bf16.msra.mxu0 0
  %1150 = vmatprep.mubr.bf16.mxu0 0
  %1151 = vmatmul.mubr.bf16.gmra.mxu0 %v1113
  %v1152 = vpop.f32.mrf.mxu0
  %v1153 = vadd.f32 %v1096, %v1152
  %v1154 = vpop.f32.mrf.mxu0
  %v1155 = vpop.f32.mrf.mxu0
  %v1156 = vadd.f32 %v1097, %v1155
  %v1157 = vpop.f32.mrf.mxu0
  %1158 = vmatprep.mubr.bf16.mxu0 0
  %1159 = vmatmul.mubr.bf16.gmra.mxu0 %v1116
  %v1160 = vpop.f32.mrf.mxu0
  %v1161 = vadd.f32 %v1098, %v1160
  %v1162 = vpop.f32.mrf.mxu0
  %v1163 = vpop.f32.mrf.mxu0
  %v1164 = vadd.f32 %v1099, %v1163
  %v1165 = vpop.f32.mrf.mxu0
  %1166 = vdwg.mxu0
  %v1167 = vld [vmem:[%s0 + $0x70] sm:$0xf]
  %v1168 = vld [vmem:[%s0 + $0x74] sm:$0xf]
  %v1169 = vld [vmem:[%s0 + $0x78] sm:$0xf]
  %v1170 = vld [vmem:[%s0 + $0x7c] sm:$0xf]
  %v1171 = vld [vmem:[%s1 + $0x1e0] sm:$0xff]
  %v1172 = vld [vmem:[%s1 + $0x1e8] sm:$0xff]
  %v1173 = vld [vmem:[%s1 + $0x1f0] sm:$0xff]
  %v1174 = vld [vmem:[%s1 + $0x1f8] sm:$0xff]
  %v1179 = vunpack.c.l.b16 %v1167
  %v1180 = vunpack.c.l.b16 %v1168
  %v1181 = vunpack.c.l.b16 %v1169
  %v1182 = vunpack.c.l.b16 %v1170
  %v1183 = vpack.c.b16 %v1180, %v1179
  %v1184 = vpack.c.b16 %v1182, %v1181
  %1187 = vmatprep.subr.bf16.mxu0 0
  %1188 = vmatpush1.bf16.msra.mxu0 0
  %1189 = vmatprep.subr.bf16.mxu0 0
  %1190 = vmatpush1.bf16.msra.mxu0 0
  %1191 = vmatprep.subr.bf16.mxu0 0
  %1192 = vmatpush1.bf16.msra.mxu0 0
  %1193 = vmatprep.subr.bf16.mxu0 0
  %1194 = vmatpush1.bf16.msra.mxu0 0
  %1195 = vmatprep.subr.bf16.mxu0 0
  %1196 = vmatpush1.bf16.msra.mxu0 0
  %1197 = vmatprep.subr.bf16.mxu0 0
  %1198 = vmatpush1.bf16.msra.mxu0 0
  %1199 = vmatprep.subr.bf16.mxu0 0
  %1200 = vmatpush1.bf16.msra.mxu0 %v1184
  %1201 = vmatprep.subr.bf16.mxu0 0
  %1202 = vmatpush1.bf16.msra.mxu0 %v1183
  %1203 = vmatprep.subr.bf16.mxu0 0
  %1204 = vmatpush2.bf16.msra.mxu0 0
  %1205 = vmatprep.subr.bf16.mxu0 0
  %1206 = vmatpush2.bf16.msra.mxu0 0
  %1207 = vmatprep.subr.bf16.mxu0 0
  %1208 = vmatpush2.bf16.msra.mxu0 0
  %1209 = vmatprep.subr.bf16.mxu0 0
  %1210 = vmatpush2.bf16.msra.mxu0 0
  %1211 = vmatprep.subr.bf16.mxu0 0
  %1212 = vmatpush2.bf16.msra.mxu0 0
  %1213 = vmatprep.subr.bf16.mxu0 0
  %1214 = vmatpush2.bf16.msra.mxu0 0
  %1215 = vmatprep.subr.bf16.mxu0 0
  %1216 = vmatpush2.bf16.msra.mxu0 0
  %1217 = vmatprep.subr.bf16.mxu0 0
  %1218 = vmatpush2.bf16.msra.mxu0 0
  %1219 = vmatprep.mubr.bf16.mxu0 0
  %1220 = vmatmul.mubr.bf16.gmra.mxu0 %v1113
  %v1221 = vpop.f32.mrf.mxu0
  %v1222 = vadd.f32 %v1171, %v1221
  %v1223 = vpop.f32.mrf.mxu0
  %v1224 = vpop.f32.mrf.mxu0
  %v1225 = vadd.f32 %v1172, %v1224
  %v1226 = vpop.f32.mrf.mxu0
  %1227 = vmatprep.mubr.bf16.mxu0 0
  %1228 = vmatmul.mubr.bf16.gmra.mxu0 %v1116
  %v1229 = vpop.f32.mrf.mxu0
  %v1230 = vadd.f32 %v1173, %v1229
  %v1231 = vpop.f32.mrf.mxu0
  %v1232 = vpop.f32.mrf.mxu0
  %v1233 = vadd.f32 %v1174, %v1232
  %v1234 = vpop.f32.mrf.mxu0
  %1235 = vdwg.mxu0
  %v1236 = vtanh.pop %v1153
  %v1237 = vtanh.pop %v1156
  %v1238 = vtanh.pop %v1161
  %v1239 = vtanh.pop %v1164
  %v1240 = vmul.f32 %v1236, %v1222
  %v1241 = vmul.f32 %v1237, %v1225
  %v1242 = vmul.f32 %v1238, %v1230
  %v1243 = vmul.f32 %v1239, %v1233
  %v1244 = vadd.f32 %v1034, %v1240
  %v1245 = vadd.f32 %v1035, %v1241
  %v1246 = vadd.f32 %v1036, %v1242
  %v1247 = vadd.f32 %v1037, %v1243
  %v1248 = vsel %vm32, %v1244, 0.0
  %1249 = vadd.xlane.f32.xlu0 %v1248
  %v1250 = vpop.xlane.xlu0 %1249
  %v1251 = vsel %vm32, %v1245, 0.0
  %1252 = vadd.xlane.f32.xlu0 %v1251
  %v1253 = vpop.xlane.xlu0 %1252
  %v1254 = vsel %vm32, %v1246, 0.0
  %1255 = vadd.xlane.f32.xlu0 %v1254
  %v1256 = vpop.xlane.xlu0 %1255
  %v1257 = vsel %vm32, %v1247, 0.0
  %1258 = vadd.xlane.f32.xlu0 %v1257
  %v1259 = vpop.xlane.xlu0 %1258
  %v1260 = vmul.f32 %v1250, %v45
  %v1261 = vmul.f32 %v1253, %v45
  %v1262 = vmul.f32 %v1256, %v45
  %v1263 = vmul.f32 %v1259, %v45
  %v1264 = vsub.f32 %v1244, %v1260
  %v1265 = vsub.f32 %v1245, %v1261
  %v1266 = vsub.f32 %v1246, %v1262
  %v1267 = vsub.f32 %v1247, %v1263
  %v1268 = vmul.f32 %v1264, %v1264
  %v1269 = vmul.f32 %v1265, %v1265
  %v1270 = vmul.f32 %v1266, %v1266
  %v1271 = vmul.f32 %v1267, %v1267
  %v1272 = vsel %vm32, %v1268, 0.0
  %1273 = vadd.xlane.f32.xlu0 %v1272
  %v1274 = vpop.xlane.xlu0 %1273
  %v1275 = vsel %vm32, %v1269, 0.0
  %1276 = vadd.xlane.f32.xlu0 %v1275
  %v1277 = vpop.xlane.xlu0 %1276
  %v1278 = vsel %vm32, %v1270, 0.0
  %1279 = vadd.xlane.f32.xlu0 %v1278
  %v1280 = vpop.xlane.xlu0 %1279
  %v1281 = vsel %vm32, %v1271, 0.0
  %1282 = vadd.xlane.f32.xlu0 %v1281
  %v1283 = vpop.xlane.xlu0 %1282
  %v1284 = vmul.f32 %v1274, %v45
  %v1285 = vmul.f32 %v1277, %v45
  %v1286 = vmul.f32 %v1280, %v45
  %v1287 = vmul.f32 %v1283, %v45
  %v1288 = vadd.f32 %v1284, 1e-05
  %v1289 = vadd.f32 %v1285, 1e-05
  %v1290 = vadd.f32 %v1286, 1e-05
  %v1291 = vadd.f32 %v1287, 1e-05
  %v1292 = vrsqrt.pop %v1288
  %v1293 = vrsqrt.pop %v1289
  %v1294 = vrsqrt.pop %v1290
  %v1295 = vrsqrt.pop %v1291
  %v1296 = vmul.f32 %v1264, %v1292
  %v1297 = vmul.f32 %v1265, %v1293
  %v1298 = vmul.f32 %v1266, %v1294
  %v1299 = vmul.f32 %v1267, %v1295
  %v1300 = vpack.c.bf16 %v1297, %v1296
  %v1301 = vpack.c.bf16 %v1299, %v1298
  %v1302 = vld [vmem:[%s0 + $0x80] sm:$0xf]
  %v1303 = vld [vmem:[%s0 + $0x84] sm:$0xf]
  %v1304 = vld [vmem:[%s0 + $0x88] sm:$0xf]
  %v1305 = vld [vmem:[%s0 + $0x8c] sm:$0xf]
  %v1306 = vld [vmem:[%s1 + $0x200] sm:$0xff]
  %v1307 = vld [vmem:[%s1 + $0x208] sm:$0xff]
  %v1308 = vld [vmem:[%s1 + $0x210] sm:$0xff]
  %v1309 = vld [vmem:[%s1 + $0x218] sm:$0xff]
  %v1314 = vunpack.c.l.b16 %v1302
  %v1315 = vunpack.c.l.b16 %v1303
  %v1316 = vunpack.c.l.b16 %v1304
  %v1317 = vunpack.c.l.b16 %v1305
  %v1318 = vpack.c.b16 %v1315, %v1314
  %v1319 = vpack.c.b16 %v1317, %v1316
  %v1323 = vsel %vm32, %v1300, 0
  %v1326 = vsel %vm32, %v1301, 0
  %1328 = vmatprep.subr.bf16.mxu0 0
  %1329 = vmatpush1.bf16.msra.mxu0 0
  %1330 = vmatprep.subr.bf16.mxu0 0
  %1331 = vmatpush1.bf16.msra.mxu0 0
  %1332 = vmatprep.subr.bf16.mxu0 0
  %1333 = vmatpush1.bf16.msra.mxu0 0
  %1334 = vmatprep.subr.bf16.mxu0 0
  %1335 = vmatpush1.bf16.msra.mxu0 0
  %1336 = vmatprep.subr.bf16.mxu0 0
  %1337 = vmatpush1.bf16.msra.mxu0 0
  %1338 = vmatprep.subr.bf16.mxu0 0
  %1339 = vmatpush1.bf16.msra.mxu0 0
  %1340 = vmatprep.subr.bf16.mxu0 0
  %1341 = vmatpush1.bf16.msra.mxu0 %v1319
  %1342 = vmatprep.subr.bf16.mxu0 0
  %1343 = vmatpush1.bf16.msra.mxu0 %v1318
  %1344 = vmatprep.subr.bf16.mxu0 0
  %1345 = vmatpush2.bf16.msra.mxu0 0
  %1346 = vmatprep.subr.bf16.mxu0 0
  %1347 = vmatpush2.bf16.msra.mxu0 0
  %1348 = vmatprep.subr.bf16.mxu0 0
  %1349 = vmatpush2.bf16.msra.mxu0 0
  %1350 = vmatprep.subr.bf16.mxu0 0
  %1351 = vmatpush2.bf16.msra.mxu0 0
  %1352 = vmatprep.subr.bf16.mxu0 0
  %1353 = vmatpush2.bf16.msra.mxu0 0
  %1354 = vmatprep.subr.bf16.mxu0 0
  %1355 = vmatpush2.bf16.msra.mxu0 0
  %1356 = vmatprep.subr.bf16.mxu0 0
  %1357 = vmatpush2.bf16.msra.mxu0 0
  %1358 = vmatprep.subr.bf16.mxu0 0
  %1359 = vmatpush2.bf16.msra.mxu0 0
  %1360 = vmatprep.mubr.bf16.mxu0 0
  %1361 = vmatmul.mubr.bf16.gmra.mxu0 %v1323
  %v1362 = vpop.f32.mrf.mxu0
  %v1363 = vadd.f32 %v1306, %v1362
  %v1364 = vpop.f32.mrf.mxu0
  %v1365 = vpop.f32.mrf.mxu0
  %v1366 = vadd.f32 %v1307, %v1365
  %v1367 = vpop.f32.mrf.mxu0
  %1368 = vmatprep.mubr.bf16.mxu0 0
  %1369 = vmatmul.mubr.bf16.gmra.mxu0 %v1326
  %v1370 = vpop.f32.mrf.mxu0
  %v1371 = vadd.f32 %v1308, %v1370
  %v1372 = vpop.f32.mrf.mxu0
  %v1373 = vpop.f32.mrf.mxu0
  %v1374 = vadd.f32 %v1309, %v1373
  %v1375 = vpop.f32.mrf.mxu0
  %1376 = vdwg.mxu0
  %v1377 = vld [vmem:[%s0 + $0x90] sm:$0xf]
  %v1378 = vld [vmem:[%s0 + $0x94] sm:$0xf]
  %v1379 = vld [vmem:[%s0 + $0x98] sm:$0xf]
  %v1380 = vld [vmem:[%s0 + $0x9c] sm:$0xf]
  %v1381 = vld [vmem:[%s1 + $0x220] sm:$0xff]
  %v1382 = vld [vmem:[%s1 + $0x228] sm:$0xff]
  %v1383 = vld [vmem:[%s1 + $0x230] sm:$0xff]
  %v1384 = vld [vmem:[%s1 + $0x238] sm:$0xff]
  %v1389 = vunpack.c.l.b16 %v1377
  %v1390 = vunpack.c.l.b16 %v1378
  %v1391 = vunpack.c.l.b16 %v1379
  %v1392 = vunpack.c.l.b16 %v1380
  %v1393 = vpack.c.b16 %v1390, %v1389
  %v1394 = vpack.c.b16 %v1392, %v1391
  %1397 = vmatprep.subr.bf16.mxu0 0
  %1398 = vmatpush1.bf16.msra.mxu0 0
  %1399 = vmatprep.subr.bf16.mxu0 0
  %1400 = vmatpush1.bf16.msra.mxu0 0
  %1401 = vmatprep.subr.bf16.mxu0 0
  %1402 = vmatpush1.bf16.msra.mxu0 0
  %1403 = vmatprep.subr.bf16.mxu0 0
  %1404 = vmatpush1.bf16.msra.mxu0 0
  %1405 = vmatprep.subr.bf16.mxu0 0
  %1406 = vmatpush1.bf16.msra.mxu0 0
  %1407 = vmatprep.subr.bf16.mxu0 0
  %1408 = vmatpush1.bf16.msra.mxu0 0
  %1409 = vmatprep.subr.bf16.mxu0 0
  %1410 = vmatpush1.bf16.msra.mxu0 %v1394
  %1411 = vmatprep.subr.bf16.mxu0 0
  %1412 = vmatpush1.bf16.msra.mxu0 %v1393
  %1413 = vmatprep.subr.bf16.mxu0 0
  %1414 = vmatpush2.bf16.msra.mxu0 0
  %1415 = vmatprep.subr.bf16.mxu0 0
  %1416 = vmatpush2.bf16.msra.mxu0 0
  %1417 = vmatprep.subr.bf16.mxu0 0
  %1418 = vmatpush2.bf16.msra.mxu0 0
  %1419 = vmatprep.subr.bf16.mxu0 0
  %1420 = vmatpush2.bf16.msra.mxu0 0
  %1421 = vmatprep.subr.bf16.mxu0 0
  %1422 = vmatpush2.bf16.msra.mxu0 0
  %1423 = vmatprep.subr.bf16.mxu0 0
  %1424 = vmatpush2.bf16.msra.mxu0 0
  %1425 = vmatprep.subr.bf16.mxu0 0
  %1426 = vmatpush2.bf16.msra.mxu0 0
  %1427 = vmatprep.subr.bf16.mxu0 0
  %1428 = vmatpush2.bf16.msra.mxu0 0
  %1429 = vmatprep.mubr.bf16.mxu0 0
  %1430 = vmatmul.mubr.bf16.gmra.mxu0 %v1323
  %v1431 = vpop.f32.mrf.mxu0
  %v1432 = vadd.f32 %v1381, %v1431
  %v1433 = vpop.f32.mrf.mxu0
  %v1434 = vpop.f32.mrf.mxu0
  %v1435 = vadd.f32 %v1382, %v1434
  %v1436 = vpop.f32.mrf.mxu0
  %1437 = vmatprep.mubr.bf16.mxu0 0
  %1438 = vmatmul.mubr.bf16.gmra.mxu0 %v1326
  %v1439 = vpop.f32.mrf.mxu0
  %v1440 = vadd.f32 %v1383, %v1439
  %v1441 = vpop.f32.mrf.mxu0
  %v1442 = vpop.f32.mrf.mxu0
  %v1443 = vadd.f32 %v1384, %v1442
  %v1444 = vpop.f32.mrf.mxu0
  %1445 = vdwg.mxu0
  %v1446 = vmul.f32 %v1363, %v232
  %v1447 = vmul.f32 %v1366, %v233
  %v1448 = vmul.f32 %v1371, %v234
  %v1449 = vmul.f32 %v1374, %v235
  %v1450 = vmul.f32 %v1363, %v236
  %v1451 = vmul.f32 %v1366, %v237
  %v1452 = vmul.f32 %v1371, %v238
  %v1453 = vmul.f32 %v1374, %v239
  %v1454 = vmul.f32 %v1363, %v240
  %v1455 = vmul.f32 %v1366, %v241
  %v1456 = vmul.f32 %v1371, %v242
  %v1457 = vmul.f32 %v1374, %v243
  %v1458 = vmul.f32 %v1363, %v244
  %v1459 = vmul.f32 %v1366, %v245
  %v1460 = vmul.f32 %v1371, %v246
  %v1461 = vmul.f32 %v1374, %v247
  %v1462 = vpack.c.bf16 %v1447, %v1446
  %v1463 = vpack.c.bf16 %v1449, %v1448
  %v1464 = vpack.c.bf16 %v1451, %v1450
  %v1465 = vpack.c.bf16 %v1453, %v1452
  %v1466 = vpack.c.bf16 %v1455, %v1454
  %v1467 = vpack.c.bf16 %v1457, %v1456
  %v1468 = vpack.c.bf16 %v1459, %v1458
  %v1469 = vpack.c.bf16 %v1461, %v1460
  %v1470 = vpack.c.bf16 %v1435, %v1432
  %v1471 = vpack.c.bf16 %v1443, %v1440
  %v1473 = vsel %vm32, %v1462, 0
  %v1476 = vsel %vm32, %v1463, 0
  %v1479 = vsel %vm32, %v1464, 0
  %v1482 = vsel %vm32, %v1465, 0
  %v1485 = vsel %vm32, %v1466, 0
  %v1488 = vsel %vm32, %v1467, 0
  %v1491 = vsel %vm32, %v1468, 0
  %v1494 = vsel %vm32, %v1469, 0
  %v1497 = vsel %vm32, %v1470, 0
  %v1500 = vsel %vm32, %v1471, 0
  %1502 = vmatprep.subr.bf16.mxu0 0
  %1503 = vmatpush1.bf16.xpose.msra.mxu0 0
  %1504 = vmatprep.subr.bf16.mxu0 0
  %1505 = vmatpush1.bf16.xpose.msra.mxu0 0
  %1506 = vmatprep.subr.bf16.mxu0 0
  %1507 = vmatpush1.bf16.xpose.msra.mxu0 0
  %1508 = vmatprep.subr.bf16.mxu0 0
  %1509 = vmatpush1.bf16.xpose.msra.mxu0 0
  %1510 = vmatprep.subr.bf16.mxu0 0
  %1511 = vmatpush1.bf16.xpose.msra.mxu0 0
  %1512 = vmatprep.subr.bf16.mxu0 0
  %1513 = vmatpush1.bf16.xpose.msra.mxu0 0
  %1514 = vmatprep.subr.bf16.mxu0 0
  %1515 = vmatpush1.bf16.xpose.msra.mxu0 %v1500
  %1516 = vmatprep.subr.bf16.mxu0 0
  %1517 = vmatpush1.bf16.xpose.msra.mxu0 %v1497
  %1518 = vmatprep.subr.bf16.mxu0 0
  %1519 = vmatpush2.bf16.xpose.msra.mxu0 0
  %1520 = vmatprep.subr.bf16.mxu0 0
  %1521 = vmatpush2.bf16.xpose.msra.mxu0 0
  %1522 = vmatprep.subr.bf16.mxu0 0
  %1523 = vmatpush2.bf16.xpose.msra.mxu0 0
  %1524 = vmatprep.subr.bf16.mxu0 0
  %1525 = vmatpush2.bf16.xpose.msra.mxu0 0
  %1526 = vmatprep.subr.bf16.mxu0 0
  %1527 = vmatpush2.bf16.xpose.msra.mxu0 0
  %1528 = vmatprep.subr.bf16.mxu0 0
  %1529 = vmatpush2.bf16.xpose.msra.mxu0 0
  %1530 = vmatprep.subr.bf16.mxu0 0
  %1531 = vmatpush2.bf16.xpose.msra.mxu0 0
  %1532 = vmatprep.subr.bf16.mxu0 0
  %1533 = vmatpush2.bf16.xpose.msra.mxu0 0
  %1534 = vmatprep.mubr.bf16.mxu0 0
  %1535 = vmatmul.mubr.bf16.gmra.mxu0 %v1473
  %v1536 = vpop.f32.mrf.mxu0
  %v1537 = vadd.f32 %v274, %v1536
  %v1538 = vpop.f32.mrf.mxu0
  %v1539 = vpop.f32.mrf.mxu0
  %v1540 = vadd.f32 %v275, %v1539
  %v1541 = vpop.f32.mrf.mxu0
  %1542 = vmatprep.mubr.bf16.mxu0 0
  %1543 = vmatmul.mubr.bf16.gmra.mxu0 %v1476
  %v1544 = vpop.f32.mrf.mxu0
  %v1545 = vadd.f32 %v276, %v1544
  %v1546 = vpop.f32.mrf.mxu0
  %v1547 = vpop.f32.mrf.mxu0
  %v1548 = vadd.f32 %v277, %v1547
  %v1549 = vpop.f32.mrf.mxu0
  %1550 = vmatprep.mubr.bf16.mxu0 0
  %1551 = vmatmul.mubr.bf16.gmra.mxu0 %v1479
  %v1552 = vpop.f32.mrf.mxu0
  %v1553 = vadd.f32 %v278, %v1552
  %v1554 = vpop.f32.mrf.mxu0
  %v1555 = vpop.f32.mrf.mxu0
  %v1556 = vadd.f32 %v279, %v1555
  %v1557 = vpop.f32.mrf.mxu0
  %1558 = vmatprep.mubr.bf16.mxu0 0
  %1559 = vmatmul.mubr.bf16.gmra.mxu0 %v1482
  %v1560 = vpop.f32.mrf.mxu0
  %v1561 = vadd.f32 %v280, %v1560
  %v1562 = vpop.f32.mrf.mxu0
  %v1563 = vpop.f32.mrf.mxu0
  %v1564 = vadd.f32 %v281, %v1563
  %v1565 = vpop.f32.mrf.mxu0
  %1566 = vmatprep.mubr.bf16.mxu0 0
  %1567 = vmatmul.mubr.bf16.gmra.mxu0 %v1485
  %v1568 = vpop.f32.mrf.mxu0
  %v1569 = vadd.f32 %v282, %v1568
  %v1570 = vpop.f32.mrf.mxu0
  %v1571 = vpop.f32.mrf.mxu0
  %v1572 = vadd.f32 %v283, %v1571
  %v1573 = vpop.f32.mrf.mxu0
  %1574 = vmatprep.mubr.bf16.mxu0 0
  %1575 = vmatmul.mubr.bf16.gmra.mxu0 %v1488
  %v1576 = vpop.f32.mrf.mxu0
  %v1577 = vadd.f32 %v284, %v1576
  %v1578 = vpop.f32.mrf.mxu0
  %v1579 = vpop.f32.mrf.mxu0
  %v1580 = vadd.f32 %v285, %v1579
  %v1581 = vpop.f32.mrf.mxu0
  %1582 = vmatprep.mubr.bf16.mxu0 0
  %1583 = vmatmul.mubr.bf16.gmra.mxu0 %v1491
  %v1584 = vpop.f32.mrf.mxu0
  %v1585 = vadd.f32 %v286, %v1584
  %v1586 = vpop.f32.mrf.mxu0
  %v1587 = vpop.f32.mrf.mxu0
  %v1588 = vadd.f32 %v287, %v1587
  %v1589 = vpop.f32.mrf.mxu0
  %1590 = vmatprep.mubr.bf16.mxu0 0
  %1591 = vmatmul.mubr.bf16.gmra.mxu0 %v1494
  %v1592 = vpop.f32.mrf.mxu0
  %v1593 = vadd.f32 %v288, %v1592
  %v1594 = vpop.f32.mrf.mxu0
  %v1595 = vpop.f32.mrf.mxu0
  %v1596 = vadd.f32 %v289, %v1595
  %v1597 = vpop.f32.mrf.mxu0
  %1598 = vdwg.mxu0
  %v1599 = vsel %vm32, %v1537, -inf
  %1600 = vmax.xlane.f32.xlu0 %v1599
  %v1601 = vpop.xlane.xlu0 %1600
  %v1602 = vsel %vm32, %v1540, -inf
  %1603 = vmax.xlane.f32.xlu0 %v1602
  %v1604 = vpop.xlane.xlu0 %1603
  %v1605 = vsel %vm32, %v1545, -inf
  %1606 = vmax.xlane.f32.xlu0 %v1605
  %v1607 = vpop.xlane.xlu0 %1606
  %v1608 = vsel %vm32, %v1548, -inf
  %1609 = vmax.xlane.f32.xlu0 %v1608
  %v1610 = vpop.xlane.xlu0 %1609
  %v1611 = vsel %vm32, %v1553, -inf
  %1612 = vmax.xlane.f32.xlu0 %v1611
  %v1613 = vpop.xlane.xlu0 %1612
  %v1614 = vsel %vm32, %v1556, -inf
  %1615 = vmax.xlane.f32.xlu0 %v1614
  %v1616 = vpop.xlane.xlu0 %1615
  %v1617 = vsel %vm32, %v1561, -inf
  %1618 = vmax.xlane.f32.xlu0 %v1617
  %v1619 = vpop.xlane.xlu0 %1618
  %v1620 = vsel %vm32, %v1564, -inf
  %1621 = vmax.xlane.f32.xlu0 %v1620
  %v1622 = vpop.xlane.xlu0 %1621
  %v1623 = vsel %vm32, %v1569, -inf
  %1624 = vmax.xlane.f32.xlu0 %v1623
  %v1625 = vpop.xlane.xlu0 %1624
  %v1626 = vsel %vm32, %v1572, -inf
  %1627 = vmax.xlane.f32.xlu0 %v1626
  %v1628 = vpop.xlane.xlu0 %1627
  %v1629 = vsel %vm32, %v1577, -inf
  %1630 = vmax.xlane.f32.xlu0 %v1629
  %v1631 = vpop.xlane.xlu0 %1630
  %v1632 = vsel %vm32, %v1580, -inf
  %1633 = vmax.xlane.f32.xlu0 %v1632
  %v1634 = vpop.xlane.xlu0 %1633
  %v1635 = vsel %vm32, %v1585, -inf
  %1636 = vmax.xlane.f32.xlu0 %v1635
  %v1637 = vpop.xlane.xlu0 %1636
  %v1638 = vsel %vm32, %v1588, -inf
  %1639 = vmax.xlane.f32.xlu0 %v1638
  %v1640 = vpop.xlane.xlu0 %1639
  %v1641 = vsel %vm32, %v1593, -inf
  %1642 = vmax.xlane.f32.xlu0 %v1641
  %v1643 = vpop.xlane.xlu0 %1642
  %v1644 = vsel %vm32, %v1596, -inf
  %1645 = vmax.xlane.f32.xlu0 %v1644
  %v1646 = vpop.xlane.xlu0 %1645
  %v1647 = vsub.f32 %v1537, %v1601
  %v1648 = vsub.f32 %v1540, %v1604
  %v1649 = vsub.f32 %v1545, %v1607
  %v1650 = vsub.f32 %v1548, %v1610
  %v1651 = vsub.f32 %v1553, %v1613
  %v1652 = vsub.f32 %v1556, %v1616
  %v1653 = vsub.f32 %v1561, %v1619
  %v1654 = vsub.f32 %v1564, %v1622
  %v1655 = vsub.f32 %v1569, %v1625
  %v1656 = vsub.f32 %v1572, %v1628
  %v1657 = vsub.f32 %v1577, %v1631
  %v1658 = vsub.f32 %v1580, %v1634
  %v1659 = vsub.f32 %v1585, %v1637
  %v1660 = vsub.f32 %v1588, %v1640
  %v1661 = vsub.f32 %v1593, %v1643
  %v1662 = vsub.f32 %v1596, %v1646
  %v1663 = vmul.f32 %v1647, 1.442695
  %v1664 = vpow.pop %v1663
  %v1665 = vmul.f32 %v1648, 1.442695
  %v1666 = vpow.pop %v1665
  %v1667 = vmul.f32 %v1649, 1.442695
  %v1668 = vpow.pop %v1667
  %v1669 = vmul.f32 %v1650, 1.442695
  %v1670 = vpow.pop %v1669
  %v1671 = vmul.f32 %v1651, 1.442695
  %v1672 = vpow.pop %v1671
  %v1673 = vmul.f32 %v1652, 1.442695
  %v1674 = vpow.pop %v1673
  %v1675 = vmul.f32 %v1653, 1.442695
  %v1676 = vpow.pop %v1675
  %v1677 = vmul.f32 %v1654, 1.442695
  %v1678 = vpow.pop %v1677
  %v1679 = vmul.f32 %v1655, 1.442695
  %v1680 = vpow.pop %v1679
  %v1681 = vmul.f32 %v1656, 1.442695
  %v1682 = vpow.pop %v1681
  %v1683 = vmul.f32 %v1657, 1.442695
  %v1684 = vpow.pop %v1683
  %v1685 = vmul.f32 %v1658, 1.442695
  %v1686 = vpow.pop %v1685
  %v1687 = vmul.f32 %v1659, 1.442695
  %v1688 = vpow.pop %v1687
  %v1689 = vmul.f32 %v1660, 1.442695
  %v1690 = vpow.pop %v1689
  %v1691 = vmul.f32 %v1661, 1.442695
  %v1692 = vpow.pop %v1691
  %v1693 = vmul.f32 %v1662, 1.442695
  %v1694 = vpow.pop %v1693
  %v1695 = vsel %vm32, %v1664, 0.0
  %1696 = vadd.xlane.f32.xlu0 %v1695
  %v1697 = vpop.xlane.xlu0 %1696
  %v1698 = vsel %vm32, %v1666, 0.0
  %1699 = vadd.xlane.f32.xlu0 %v1698
  %v1700 = vpop.xlane.xlu0 %1699
  %v1701 = vsel %vm32, %v1668, 0.0
  %1702 = vadd.xlane.f32.xlu0 %v1701
  %v1703 = vpop.xlane.xlu0 %1702
  %v1704 = vsel %vm32, %v1670, 0.0
  %1705 = vadd.xlane.f32.xlu0 %v1704
  %v1706 = vpop.xlane.xlu0 %1705
  %v1707 = vsel %vm32, %v1672, 0.0
  %1708 = vadd.xlane.f32.xlu0 %v1707
  %v1709 = vpop.xlane.xlu0 %1708
  %v1710 = vsel %vm32, %v1674, 0.0
  %1711 = vadd.xlane.f32.xlu0 %v1710
  %v1712 = vpop.xlane.xlu0 %1711
  %v1713 = vsel %vm32, %v1676, 0.0
  %1714 = vadd.xlane.f32.xlu0 %v1713
  %v1715 = vpop.xlane.xlu0 %1714
  %v1716 = vsel %vm32, %v1678, 0.0
  %1717 = vadd.xlane.f32.xlu0 %v1716
  %v1718 = vpop.xlane.xlu0 %1717
  %v1719 = vsel %vm32, %v1680, 0.0
  %1720 = vadd.xlane.f32.xlu0 %v1719
  %v1721 = vpop.xlane.xlu0 %1720
  %v1722 = vsel %vm32, %v1682, 0.0
  %1723 = vadd.xlane.f32.xlu0 %v1722
  %v1724 = vpop.xlane.xlu0 %1723
  %v1725 = vsel %vm32, %v1684, 0.0
  %1726 = vadd.xlane.f32.xlu0 %v1725
  %v1727 = vpop.xlane.xlu0 %1726
  %v1728 = vsel %vm32, %v1686, 0.0
  %1729 = vadd.xlane.f32.xlu0 %v1728
  %v1730 = vpop.xlane.xlu0 %1729
  %v1731 = vsel %vm32, %v1688, 0.0
  %1732 = vadd.xlane.f32.xlu0 %v1731
  %v1733 = vpop.xlane.xlu0 %1732
  %v1734 = vsel %vm32, %v1690, 0.0
  %1735 = vadd.xlane.f32.xlu0 %v1734
  %v1736 = vpop.xlane.xlu0 %1735
  %v1737 = vsel %vm32, %v1692, 0.0
  %1738 = vadd.xlane.f32.xlu0 %v1737
  %v1739 = vpop.xlane.xlu0 %1738
  %v1740 = vsel %vm32, %v1694, 0.0
  %1741 = vadd.xlane.f32.xlu0 %v1740
  %v1742 = vpop.xlane.xlu0 %1741
  %v1743 = vrcp.pop %v1697
  %v1744 = vrcp.pop %v1700
  %v1745 = vrcp.pop %v1703
  %v1746 = vrcp.pop %v1706
  %v1747 = vrcp.pop %v1709
  %v1748 = vrcp.pop %v1712
  %v1749 = vrcp.pop %v1715
  %v1750 = vrcp.pop %v1718
  %v1751 = vrcp.pop %v1721
  %v1752 = vrcp.pop %v1724
  %v1753 = vrcp.pop %v1727
  %v1754 = vrcp.pop %v1730
  %v1755 = vrcp.pop %v1733
  %v1756 = vrcp.pop %v1736
  %v1757 = vrcp.pop %v1739
  %v1758 = vrcp.pop %v1742
  %v1759 = vmul.f32 %v1664, %v1743
  %v1760 = vmul.f32 %v1666, %v1744
  %v1761 = vmul.f32 %v1668, %v1745
  %v1762 = vmul.f32 %v1670, %v1746
  %v1763 = vmul.f32 %v1672, %v1747
  %v1764 = vmul.f32 %v1674, %v1748
  %v1765 = vmul.f32 %v1676, %v1749
  %v1766 = vmul.f32 %v1678, %v1750
  %v1767 = vmul.f32 %v1680, %v1751
  %v1768 = vmul.f32 %v1682, %v1752
  %v1769 = vmul.f32 %v1684, %v1753
  %v1770 = vmul.f32 %v1686, %v1754
  %v1771 = vmul.f32 %v1688, %v1755
  %v1772 = vmul.f32 %v1690, %v1756
  %v1773 = vmul.f32 %v1692, %v1757
  %v1774 = vmul.f32 %v1694, %v1758
  %v1775 = vpack.c.bf16 %v1760, %v1759
  %v1776 = vpack.c.bf16 %v1762, %v1761
  %v1777 = vpack.c.bf16 %v1764, %v1763
  %v1778 = vpack.c.bf16 %v1766, %v1765
  %v1779 = vpack.c.bf16 %v1768, %v1767
  %v1780 = vpack.c.bf16 %v1770, %v1769
  %v1781 = vpack.c.bf16 %v1772, %v1771
  %v1782 = vpack.c.bf16 %v1774, %v1773
  %v1784 = vsel %vm32, %v1775, 0
  %v1787 = vsel %vm32, %v1776, 0
  %v1790 = vsel %vm32, %v1777, 0
  %v1793 = vsel %vm32, %v1778, 0
  %v1796 = vsel %vm32, %v1779, 0
  %v1799 = vsel %vm32, %v1780, 0
  %v1802 = vsel %vm32, %v1781, 0
  %v1805 = vsel %vm32, %v1782, 0
  %1807 = vmatprep.subr.bf16.mxu0 0
  %1808 = vmatpush1.bf16.msra.mxu0 0
  %1809 = vmatprep.subr.bf16.mxu0 0
  %1810 = vmatpush1.bf16.msra.mxu0 0
  %1811 = vmatprep.subr.bf16.mxu0 0
  %1812 = vmatpush1.bf16.msra.mxu0 0
  %1813 = vmatprep.subr.bf16.mxu0 0
  %1814 = vmatpush1.bf16.msra.mxu0 0
  %1815 = vmatprep.subr.bf16.mxu0 0
  %1816 = vmatpush1.bf16.msra.mxu0 0
  %1817 = vmatprep.subr.bf16.mxu0 0
  %1818 = vmatpush1.bf16.msra.mxu0 0
  %1819 = vmatprep.subr.bf16.mxu0 0
  %1820 = vmatpush1.bf16.msra.mxu0 %v1301
  %1821 = vmatprep.subr.bf16.mxu0 0
  %1822 = vmatpush1.bf16.msra.mxu0 %v1300
  %1823 = vmatprep.subr.bf16.mxu0 0
  %1824 = vmatpush2.bf16.msra.mxu0 0
  %1825 = vmatprep.subr.bf16.mxu0 0
  %1826 = vmatpush2.bf16.msra.mxu0 0
  %1827 = vmatprep.subr.bf16.mxu0 0
  %1828 = vmatpush2.bf16.msra.mxu0 0
  %1829 = vmatprep.subr.bf16.mxu0 0
  %1830 = vmatpush2.bf16.msra.mxu0 0
  %1831 = vmatprep.subr.bf16.mxu0 0
  %1832 = vmatpush2.bf16.msra.mxu0 0
  %1833 = vmatprep.subr.bf16.mxu0 0
  %1834 = vmatpush2.bf16.msra.mxu0 0
  %1835 = vmatprep.subr.bf16.mxu0 0
  %1836 = vmatpush2.bf16.msra.mxu0 0
  %1837 = vmatprep.subr.bf16.mxu0 0
  %1838 = vmatpush2.bf16.msra.mxu0 0
  %1839 = vmatprep.mubr.bf16.mxu0 0
  %1840 = vmatmul.mubr.bf16.gmra.mxu0 %v1784
  %v1841 = vpop.f32.mrf.mxu0
  %v1842 = vadd.f32 0.0, %v1841
  %v1843 = vpop.f32.mrf.mxu0
  %v1844 = vpop.f32.mrf.mxu0
  %v1845 = vadd.f32 0.0, %v1844
  %v1846 = vpop.f32.mrf.mxu0
  %1847 = vmatprep.mubr.bf16.mxu0 0
  %1848 = vmatmul.mubr.bf16.gmra.mxu0 %v1787
  %v1849 = vpop.f32.mrf.mxu0
  %v1850 = vadd.f32 0.0, %v1849
  %v1851 = vpop.f32.mrf.mxu0
  %v1852 = vpop.f32.mrf.mxu0
  %v1853 = vadd.f32 0.0, %v1852
  %v1854 = vpop.f32.mrf.mxu0
  %1855 = vmatprep.mubr.bf16.mxu0 0
  %1856 = vmatmul.mubr.bf16.gmra.mxu0 %v1790
  %v1857 = vpop.f32.mrf.mxu0
  %v1858 = vadd.f32 0.0, %v1857
  %v1859 = vpop.f32.mrf.mxu0
  %v1860 = vpop.f32.mrf.mxu0
  %v1861 = vadd.f32 0.0, %v1860
  %v1862 = vpop.f32.mrf.mxu0
  %1863 = vmatprep.mubr.bf16.mxu0 0
  %1864 = vmatmul.mubr.bf16.gmra.mxu0 %v1793
  %v1865 = vpop.f32.mrf.mxu0
  %v1866 = vadd.f32 0.0, %v1865
  %v1867 = vpop.f32.mrf.mxu0
  %v1868 = vpop.f32.mrf.mxu0
  %v1869 = vadd.f32 0.0, %v1868
  %v1870 = vpop.f32.mrf.mxu0
  %1871 = vmatprep.mubr.bf16.mxu0 0
  %1872 = vmatmul.mubr.bf16.gmra.mxu0 %v1796
  %v1873 = vpop.f32.mrf.mxu0
  %v1874 = vadd.f32 0.0, %v1873
  %v1875 = vpop.f32.mrf.mxu0
  %v1876 = vpop.f32.mrf.mxu0
  %v1877 = vadd.f32 0.0, %v1876
  %v1878 = vpop.f32.mrf.mxu0
  %1879 = vmatprep.mubr.bf16.mxu0 0
  %1880 = vmatmul.mubr.bf16.gmra.mxu0 %v1799
  %v1881 = vpop.f32.mrf.mxu0
  %v1882 = vadd.f32 0.0, %v1881
  %v1883 = vpop.f32.mrf.mxu0
  %v1884 = vpop.f32.mrf.mxu0
  %v1885 = vadd.f32 0.0, %v1884
  %v1886 = vpop.f32.mrf.mxu0
  %1887 = vmatprep.mubr.bf16.mxu0 0
  %1888 = vmatmul.mubr.bf16.gmra.mxu0 %v1802
  %v1889 = vpop.f32.mrf.mxu0
  %v1890 = vadd.f32 0.0, %v1889
  %v1891 = vpop.f32.mrf.mxu0
  %v1892 = vpop.f32.mrf.mxu0
  %v1893 = vadd.f32 0.0, %v1892
  %v1894 = vpop.f32.mrf.mxu0
  %1895 = vmatprep.mubr.bf16.mxu0 0
  %1896 = vmatmul.mubr.bf16.gmra.mxu0 %v1805
  %v1897 = vpop.f32.mrf.mxu0
  %v1898 = vadd.f32 0.0, %v1897
  %v1899 = vpop.f32.mrf.mxu0
  %v1900 = vpop.f32.mrf.mxu0
  %v1901 = vadd.f32 0.0, %v1900
  %v1902 = vpop.f32.mrf.mxu0
  %1903 = vdwg.mxu0
  %v1904 = vld [vmem:[%s1 + $0x240] sm:$0xff]
  %v1905 = vld [vmem:[%s1 + $0x248] sm:$0xff]
  %v1906 = vld [vmem:[%s1 + $0x250] sm:$0xff]
  %v1907 = vld [vmem:[%s1 + $0x258] sm:$0xff]
  %v1908 = vpack.c.bf16 %v1845, %v1842
  %v1909 = vpack.c.bf16 %v1853, %v1850
  %v1910 = vld [vmem:[%s0 + $0xa0] sm:$0xf]
  %v1911 = vld [vmem:[%s0 + $0xa4] sm:$0xf]
  %v1912 = vld [vmem:[%s0 + $0xa8] sm:$0xf]
  %v1913 = vld [vmem:[%s0 + $0xac] sm:$0xf]
  %v1918 = vunpack.c.l.b16 %v1910
  %v1919 = vunpack.c.l.b16 %v1911
  %v1920 = vunpack.c.l.b16 %v1912
  %v1921 = vunpack.c.l.b16 %v1913
  %v1922 = vpack.c.b16 %v1919, %v1918
  %v1923 = vpack.c.b16 %v1921, %v1920
  %v1927 = vsel %vm32, %v1908, 0
  %v1930 = vsel %vm32, %v1909, 0
  %1932 = vmatprep.subr.bf16.mxu0 0
  %1933 = vmatpush1.bf16.msra.mxu0 0
  %1934 = vmatprep.subr.bf16.mxu0 0
  %1935 = vmatpush1.bf16.msra.mxu0 0
  %1936 = vmatprep.subr.bf16.mxu0 0
  %1937 = vmatpush1.bf16.msra.mxu0 0
  %1938 = vmatprep.subr.bf16.mxu0 0
  %1939 = vmatpush1.bf16.msra.mxu0 0
  %1940 = vmatprep.subr.bf16.mxu0 0
  %1941 = vmatpush1.bf16.msra.mxu0 0
  %1942 = vmatprep.subr.bf16.mxu0 0
  %1943 = vmatpush1.bf16.msra.mxu0 0
  %1944 = vmatprep.subr.bf16.mxu0 0
  %1945 = vmatpush1.bf16.msra.mxu0 %v1923
  %1946 = vmatprep.subr.bf16.mxu0 0
  %1947 = vmatpush1.bf16.msra.mxu0 %v1922
  %1948 = vmatprep.subr.bf16.mxu0 0
  %1949 = vmatpush2.bf16.msra.mxu0 0
  %1950 = vmatprep.subr.bf16.mxu0 0
  %1951 = vmatpush2.bf16.msra.mxu0 0
  %1952 = vmatprep.subr.bf16.mxu0 0
  %1953 = vmatpush2.bf16.msra.mxu0 0
  %1954 = vmatprep.subr.bf16.mxu0 0
  %1955 = vmatpush2.bf16.msra.mxu0 0
  %1956 = vmatprep.subr.bf16.mxu0 0
  %1957 = vmatpush2.bf16.msra.mxu0 0
  %1958 = vmatprep.subr.bf16.mxu0 0
  %1959 = vmatpush2.bf16.msra.mxu0 0
  %1960 = vmatprep.subr.bf16.mxu0 0
  %1961 = vmatpush2.bf16.msra.mxu0 0
  %1962 = vmatprep.subr.bf16.mxu0 0
  %1963 = vmatpush2.bf16.msra.mxu0 0
  %1964 = vmatprep.mubr.bf16.mxu0 0
  %1965 = vmatmul.mubr.bf16.gmra.mxu0 %v1927
  %v1966 = vpop.f32.mrf.mxu0
  %v1967 = vadd.f32 0.0, %v1966
  %v1968 = vpop.f32.mrf.mxu0
  %v1969 = vpop.f32.mrf.mxu0
  %v1970 = vadd.f32 0.0, %v1969
  %v1971 = vpop.f32.mrf.mxu0
  %1972 = vmatprep.mubr.bf16.mxu0 0
  %1973 = vmatmul.mubr.bf16.gmra.mxu0 %v1930
  %v1974 = vpop.f32.mrf.mxu0
  %v1975 = vadd.f32 0.0, %v1974
  %v1976 = vpop.f32.mrf.mxu0
  %v1977 = vpop.f32.mrf.mxu0
  %v1978 = vadd.f32 0.0, %v1977
  %v1979 = vpop.f32.mrf.mxu0
  %1980 = vdwg.mxu0
  %v1981 = vadd.f32 %v1904, %v1967
  %v1982 = vadd.f32 %v1905, %v1970
  %v1983 = vadd.f32 %v1906, %v1975
  %v1984 = vadd.f32 %v1907, %v1978
  %v1985 = vpack.c.bf16 %v1861, %v1858
  %v1986 = vpack.c.bf16 %v1869, %v1866
  %v1987 = vld [vmem:[%s0 + $0xb0] sm:$0xf]
  %v1988 = vld [vmem:[%s0 + $0xb4] sm:$0xf]
  %v1989 = vld [vmem:[%s0 + $0xb8] sm:$0xf]
  %v1990 = vld [vmem:[%s0 + $0xbc] sm:$0xf]
  %v1995 = vunpack.c.l.b16 %v1987
  %v1996 = vunpack.c.l.b16 %v1988
  %v1997 = vunpack.c.l.b16 %v1989
  %v1998 = vunpack.c.l.b16 %v1990
  %v1999 = vpack.c.b16 %v1996, %v1995
  %v2000 = vpack.c.b16 %v1998, %v1997
  %v2004 = vsel %vm32, %v1985, 0
  %v2007 = vsel %vm32, %v1986, 0
  %2009 = vmatprep.subr.bf16.mxu0 0
  %2010 = vmatpush1.bf16.msra.mxu0 0
  %2011 = vmatprep.subr.bf16.mxu0 0
  %2012 = vmatpush1.bf16.msra.mxu0 0
  %2013 = vmatprep.subr.bf16.mxu0 0
  %2014 = vmatpush1.bf16.msra.mxu0 0
  %2015 = vmatprep.subr.bf16.mxu0 0
  %2016 = vmatpush1.bf16.msra.mxu0 0
  %2017 = vmatprep.subr.bf16.mxu0 0
  %2018 = vmatpush1.bf16.msra.mxu0 0
  %2019 = vmatprep.subr.bf16.mxu0 0
  %2020 = vmatpush1.bf16.msra.mxu0 0
  %2021 = vmatprep.subr.bf16.mxu0 0
  %2022 = vmatpush1.bf16.msra.mxu0 %v2000
  %2023 = vmatprep.subr.bf16.mxu0 0
  %2024 = vmatpush1.bf16.msra.mxu0 %v1999
  %2025 = vmatprep.subr.bf16.mxu0 0
  %2026 = vmatpush2.bf16.msra.mxu0 0
  %2027 = vmatprep.subr.bf16.mxu0 0
  %2028 = vmatpush2.bf16.msra.mxu0 0
  %2029 = vmatprep.subr.bf16.mxu0 0
  %2030 = vmatpush2.bf16.msra.mxu0 0
  %2031 = vmatprep.subr.bf16.mxu0 0
  %2032 = vmatpush2.bf16.msra.mxu0 0
  %2033 = vmatprep.subr.bf16.mxu0 0
  %2034 = vmatpush2.bf16.msra.mxu0 0
  %2035 = vmatprep.subr.bf16.mxu0 0
  %2036 = vmatpush2.bf16.msra.mxu0 0
  %2037 = vmatprep.subr.bf16.mxu0 0
  %2038 = vmatpush2.bf16.msra.mxu0 0
  %2039 = vmatprep.subr.bf16.mxu0 0
  %2040 = vmatpush2.bf16.msra.mxu0 0
  %2041 = vmatprep.mubr.bf16.mxu0 0
  %2042 = vmatmul.mubr.bf16.gmra.mxu0 %v2004
  %v2043 = vpop.f32.mrf.mxu0
  %v2044 = vadd.f32 0.0, %v2043
  %v2045 = vpop.f32.mrf.mxu0
  %v2046 = vpop.f32.mrf.mxu0
  %v2047 = vadd.f32 0.0, %v2046
  %v2048 = vpop.f32.mrf.mxu0
  %2049 = vmatprep.mubr.bf16.mxu0 0
  %2050 = vmatmul.mubr.bf16.gmra.mxu0 %v2007
  %v2051 = vpop.f32.mrf.mxu0
  %v2052 = vadd.f32 0.0, %v2051
  %v2053 = vpop.f32.mrf.mxu0
  %v2054 = vpop.f32.mrf.mxu0
  %v2055 = vadd.f32 0.0, %v2054
  %v2056 = vpop.f32.mrf.mxu0
  %2057 = vdwg.mxu0
  %v2058 = vadd.f32 %v1981, %v2044
  %v2059 = vadd.f32 %v1982, %v2047
  %v2060 = vadd.f32 %v1983, %v2052
  %v2061 = vadd.f32 %v1984, %v2055
  %v2062 = vpack.c.bf16 %v1877, %v1874
  %v2063 = vpack.c.bf16 %v1885, %v1882
  %v2064 = vld [vmem:[%s0 + $0xc0] sm:$0xf]
  %v2065 = vld [vmem:[%s0 + $0xc4] sm:$0xf]
  %v2066 = vld [vmem:[%s0 + $0xc8] sm:$0xf]
  %v2067 = vld [vmem:[%s0 + $0xcc] sm:$0xf]
  %v2072 = vunpack.c.l.b16 %v2064
  %v2073 = vunpack.c.l.b16 %v2065
  %v2074 = vunpack.c.l.b16 %v2066
  %v2075 = vunpack.c.l.b16 %v2067
  %v2076 = vpack.c.b16 %v2073, %v2072
  %v2077 = vpack.c.b16 %v2075, %v2074
  %v2081 = vsel %vm32, %v2062, 0
  %v2084 = vsel %vm32, %v2063, 0
  %2086 = vmatprep.subr.bf16.mxu0 0
  %2087 = vmatpush1.bf16.msra.mxu0 0
  %2088 = vmatprep.subr.bf16.mxu0 0
  %2089 = vmatpush1.bf16.msra.mxu0 0
  %2090 = vmatprep.subr.bf16.mxu0 0
  %2091 = vmatpush1.bf16.msra.mxu0 0
  %2092 = vmatprep.subr.bf16.mxu0 0
  %2093 = vmatpush1.bf16.msra.mxu0 0
  %2094 = vmatprep.subr.bf16.mxu0 0
  %2095 = vmatpush1.bf16.msra.mxu0 0
  %2096 = vmatprep.subr.bf16.mxu0 0
  %2097 = vmatpush1.bf16.msra.mxu0 0
  %2098 = vmatprep.subr.bf16.mxu0 0
  %2099 = vmatpush1.bf16.msra.mxu0 %v2077
  %2100 = vmatprep.subr.bf16.mxu0 0
  %2101 = vmatpush1.bf16.msra.mxu0 %v2076
  %2102 = vmatprep.subr.bf16.mxu0 0
  %2103 = vmatpush2.bf16.msra.mxu0 0
  %2104 = vmatprep.subr.bf16.mxu0 0
  %2105 = vmatpush2.bf16.msra.mxu0 0
  %2106 = vmatprep.subr.bf16.mxu0 0
  %2107 = vmatpush2.bf16.msra.mxu0 0
  %2108 = vmatprep.subr.bf16.mxu0 0
  %2109 = vmatpush2.bf16.msra.mxu0 0
  %2110 = vmatprep.subr.bf16.mxu0 0
  %2111 = vmatpush2.bf16.msra.mxu0 0
  %2112 = vmatprep.subr.bf16.mxu0 0
  %2113 = vmatpush2.bf16.msra.mxu0 0
  %2114 = vmatprep.subr.bf16.mxu0 0
  %2115 = vmatpush2.bf16.msra.mxu0 0
  %2116 = vmatprep.subr.bf16.mxu0 0
  %2117 = vmatpush2.bf16.msra.mxu0 0
  %2118 = vmatprep.mubr.bf16.mxu0 0
  %2119 = vmatmul.mubr.bf16.gmra.mxu0 %v2081
  %v2120 = vpop.f32.mrf.mxu0
  %v2121 = vadd.f32 0.0, %v2120
  %v2122 = vpop.f32.mrf.mxu0
  %v2123 = vpop.f32.mrf.mxu0
  %v2124 = vadd.f32 0.0, %v2123
  %v2125 = vpop.f32.mrf.mxu0
  %2126 = vmatprep.mubr.bf16.mxu0 0
  %2127 = vmatmul.mubr.bf16.gmra.mxu0 %v2084
  %v2128 = vpop.f32.mrf.mxu0
  %v2129 = vadd.f32 0.0, %v2128
  %v2130 = vpop.f32.mrf.mxu0
  %v2131 = vpop.f32.mrf.mxu0
  %v2132 = vadd.f32 0.0, %v2131
  %v2133 = vpop.f32.mrf.mxu0
  %2134 = vdwg.mxu0
  %v2135 = vadd.f32 %v2058, %v2121
  %v2136 = vadd.f32 %v2059, %v2124
  %v2137 = vadd.f32 %v2060, %v2129
  %v2138 = vadd.f32 %v2061, %v2132
  %v2139 = vpack.c.bf16 %v1893, %v1890
  %v2140 = vpack.c.bf16 %v1901, %v1898
  %v2141 = vld [vmem:[%s0 + $0xd0] sm:$0xf]
  %v2142 = vld [vmem:[%s0 + $0xd4] sm:$0xf]
  %v2143 = vld [vmem:[%s0 + $0xd8] sm:$0xf]
  %v2144 = vld [vmem:[%s0 + $0xdc] sm:$0xf]
  %v2149 = vunpack.c.l.b16 %v2141
  %v2150 = vunpack.c.l.b16 %v2142
  %v2151 = vunpack.c.l.b16 %v2143
  %v2152 = vunpack.c.l.b16 %v2144
  %v2153 = vpack.c.b16 %v2150, %v2149
  %v2154 = vpack.c.b16 %v2152, %v2151
  %v2158 = vsel %vm32, %v2139, 0
  %v2161 = vsel %vm32, %v2140, 0
  %2163 = vmatprep.subr.bf16.mxu0 0
  %2164 = vmatpush1.bf16.msra.mxu0 0
  %2165 = vmatprep.subr.bf16.mxu0 0
  %2166 = vmatpush1.bf16.msra.mxu0 0
  %2167 = vmatprep.subr.bf16.mxu0 0
  %2168 = vmatpush1.bf16.msra.mxu0 0
  %2169 = vmatprep.subr.bf16.mxu0 0
  %2170 = vmatpush1.bf16.msra.mxu0 0
  %2171 = vmatprep.subr.bf16.mxu0 0
  %2172 = vmatpush1.bf16.msra.mxu0 0
  %2173 = vmatprep.subr.bf16.mxu0 0
  %2174 = vmatpush1.bf16.msra.mxu0 0
  %2175 = vmatprep.subr.bf16.mxu0 0
  %2176 = vmatpush1.bf16.msra.mxu0 %v2154
  %2177 = vmatprep.subr.bf16.mxu0 0
  %2178 = vmatpush1.bf16.msra.mxu0 %v2153
  %2179 = vmatprep.subr.bf16.mxu0 0
  %2180 = vmatpush2.bf16.msra.mxu0 0
  %2181 = vmatprep.subr.bf16.mxu0 0
  %2182 = vmatpush2.bf16.msra.mxu0 0
  %2183 = vmatprep.subr.bf16.mxu0 0
  %2184 = vmatpush2.bf16.msra.mxu0 0
  %2185 = vmatprep.subr.bf16.mxu0 0
  %2186 = vmatpush2.bf16.msra.mxu0 0
  %2187 = vmatprep.subr.bf16.mxu0 0
  %2188 = vmatpush2.bf16.msra.mxu0 0
  %2189 = vmatprep.subr.bf16.mxu0 0
  %2190 = vmatpush2.bf16.msra.mxu0 0
  %2191 = vmatprep.subr.bf16.mxu0 0
  %2192 = vmatpush2.bf16.msra.mxu0 0
  %2193 = vmatprep.subr.bf16.mxu0 0
  %2194 = vmatpush2.bf16.msra.mxu0 0
  %2195 = vmatprep.mubr.bf16.mxu0 0
  %2196 = vmatmul.mubr.bf16.gmra.mxu0 %v2158
  %v2197 = vpop.f32.mrf.mxu0
  %v2198 = vadd.f32 0.0, %v2197
  %v2199 = vpop.f32.mrf.mxu0
  %v2200 = vpop.f32.mrf.mxu0
  %v2201 = vadd.f32 0.0, %v2200
  %v2202 = vpop.f32.mrf.mxu0
  %2203 = vmatprep.mubr.bf16.mxu0 0
  %2204 = vmatmul.mubr.bf16.gmra.mxu0 %v2161
  %v2205 = vpop.f32.mrf.mxu0
  %v2206 = vadd.f32 0.0, %v2205
  %v2207 = vpop.f32.mrf.mxu0
  %v2208 = vpop.f32.mrf.mxu0
  %v2209 = vadd.f32 0.0, %v2208
  %v2210 = vpop.f32.mrf.mxu0
  %2211 = vdwg.mxu0
  %v2212 = vadd.f32 %v2135, %v2198
  %v2213 = vadd.f32 %v2136, %v2201
  %v2214 = vadd.f32 %v2137, %v2206
  %v2215 = vadd.f32 %v2138, %v2209
  %v2216 = vadd.f32 %v1244, %v2212
  %v2217 = vadd.f32 %v1245, %v2213
  %v2218 = vadd.f32 %v1246, %v2214
  %v2219 = vadd.f32 %v1247, %v2215
  %v2220 = vsel %vm32, %v2216, 0.0
  %2221 = vadd.xlane.f32.xlu0 %v2220
  %v2222 = vpop.xlane.xlu0 %2221
  %v2223 = vsel %vm32, %v2217, 0.0
  %2224 = vadd.xlane.f32.xlu0 %v2223
  %v2225 = vpop.xlane.xlu0 %2224
  %v2226 = vsel %vm32, %v2218, 0.0
  %2227 = vadd.xlane.f32.xlu0 %v2226
  %v2228 = vpop.xlane.xlu0 %2227
  %v2229 = vsel %vm32, %v2219, 0.0
  %2230 = vadd.xlane.f32.xlu0 %v2229
  %v2231 = vpop.xlane.xlu0 %2230
  %v2232 = vmul.f32 %v2222, %v45
  %v2233 = vmul.f32 %v2225, %v45
  %v2234 = vmul.f32 %v2228, %v45
  %v2235 = vmul.f32 %v2231, %v45
  %v2236 = vsub.f32 %v2216, %v2232
  %v2237 = vsub.f32 %v2217, %v2233
  %v2238 = vsub.f32 %v2218, %v2234
  %v2239 = vsub.f32 %v2219, %v2235
  %v2240 = vmul.f32 %v2236, %v2236
  %v2241 = vmul.f32 %v2237, %v2237
  %v2242 = vmul.f32 %v2238, %v2238
  %v2243 = vmul.f32 %v2239, %v2239
  %v2244 = vsel %vm32, %v2240, 0.0
  %2245 = vadd.xlane.f32.xlu0 %v2244
  %v2246 = vpop.xlane.xlu0 %2245
  %v2247 = vsel %vm32, %v2241, 0.0
  %2248 = vadd.xlane.f32.xlu0 %v2247
  %v2249 = vpop.xlane.xlu0 %2248
  %v2250 = vsel %vm32, %v2242, 0.0
  %2251 = vadd.xlane.f32.xlu0 %v2250
  %v2252 = vpop.xlane.xlu0 %2251
  %v2253 = vsel %vm32, %v2243, 0.0
  %2254 = vadd.xlane.f32.xlu0 %v2253
  %v2255 = vpop.xlane.xlu0 %2254
  %v2256 = vmul.f32 %v2246, %v45
  %v2257 = vmul.f32 %v2249, %v45
  %v2258 = vmul.f32 %v2252, %v45
  %v2259 = vmul.f32 %v2255, %v45
  %v2260 = vadd.f32 %v2256, 1e-05
  %v2261 = vadd.f32 %v2257, 1e-05
  %v2262 = vadd.f32 %v2258, 1e-05
  %v2263 = vadd.f32 %v2259, 1e-05
  %v2264 = vrsqrt.pop %v2260
  %v2265 = vrsqrt.pop %v2261
  %v2266 = vrsqrt.pop %v2262
  %v2267 = vrsqrt.pop %v2263
  %v2268 = vmul.f32 %v2236, %v2264
  %v2269 = vmul.f32 %v2237, %v2265
  %v2270 = vmul.f32 %v2238, %v2266
  %v2271 = vmul.f32 %v2239, %v2267
  %v2272 = vpack.c.bf16 %v2269, %v2268
  %v2273 = vpack.c.bf16 %v2271, %v2270
  %v2274 = vld [vmem:[%s0 + $0xe0] sm:$0xf]
  %v2275 = vld [vmem:[%s0 + $0xe4] sm:$0xf]
  %v2276 = vld [vmem:[%s0 + $0xe8] sm:$0xf]
  %v2277 = vld [vmem:[%s0 + $0xec] sm:$0xf]
  %v2278 = vld [vmem:[%s1 + $0x260] sm:$0xff]
  %v2279 = vld [vmem:[%s1 + $0x268] sm:$0xff]
  %v2280 = vld [vmem:[%s1 + $0x270] sm:$0xff]
  %v2281 = vld [vmem:[%s1 + $0x278] sm:$0xff]
  %v2286 = vunpack.c.l.b16 %v2274
  %v2287 = vunpack.c.l.b16 %v2275
  %v2288 = vunpack.c.l.b16 %v2276
  %v2289 = vunpack.c.l.b16 %v2277
  %v2290 = vpack.c.b16 %v2287, %v2286
  %v2291 = vpack.c.b16 %v2289, %v2288
  %v2295 = vsel %vm32, %v2272, 0
  %v2298 = vsel %vm32, %v2273, 0
  %2300 = vmatprep.subr.bf16.mxu0 0
  %2301 = vmatpush1.bf16.msra.mxu0 0
  %2302 = vmatprep.subr.bf16.mxu0 0
  %2303 = vmatpush1.bf16.msra.mxu0 0
  %2304 = vmatprep.subr.bf16.mxu0 0
  %2305 = vmatpush1.bf16.msra.mxu0 0
  %2306 = vmatprep.subr.bf16.mxu0 0
  %2307 = vmatpush1.bf16.msra.mxu0 0
  %2308 = vmatprep.subr.bf16.mxu0 0
  %2309 = vmatpush1.bf16.msra.mxu0 0
  %2310 = vmatprep.subr.bf16.mxu0 0
  %2311 = vmatpush1.bf16.msra.mxu0 0
  %2312 = vmatprep.subr.bf16.mxu0 0
  %2313 = vmatpush1.bf16.msra.mxu0 %v2291
  %2314 = vmatprep.subr.bf16.mxu0 0
  %2315 = vmatpush1.bf16.msra.mxu0 %v2290
  %2316 = vmatprep.subr.bf16.mxu0 0
  %2317 = vmatpush2.bf16.msra.mxu0 0
  %2318 = vmatprep.subr.bf16.mxu0 0
  %2319 = vmatpush2.bf16.msra.mxu0 0
  %2320 = vmatprep.subr.bf16.mxu0 0
  %2321 = vmatpush2.bf16.msra.mxu0 0
  %2322 = vmatprep.subr.bf16.mxu0 0
  %2323 = vmatpush2.bf16.msra.mxu0 0
  %2324 = vmatprep.subr.bf16.mxu0 0
  %2325 = vmatpush2.bf16.msra.mxu0 0
  %2326 = vmatprep.subr.bf16.mxu0 0
  %2327 = vmatpush2.bf16.msra.mxu0 0
  %2328 = vmatprep.subr.bf16.mxu0 0
  %2329 = vmatpush2.bf16.msra.mxu0 0
  %2330 = vmatprep.subr.bf16.mxu0 0
  %2331 = vmatpush2.bf16.msra.mxu0 0
  %2332 = vmatprep.mubr.bf16.mxu0 0
  %2333 = vmatmul.mubr.bf16.gmra.mxu0 %v2295
  %v2334 = vpop.f32.mrf.mxu0
  %v2335 = vadd.f32 %v2278, %v2334
  %v2336 = vpop.f32.mrf.mxu0
  %v2337 = vpop.f32.mrf.mxu0
  %v2338 = vadd.f32 %v2279, %v2337
  %v2339 = vpop.f32.mrf.mxu0
  %2340 = vmatprep.mubr.bf16.mxu0 0
  %2341 = vmatmul.mubr.bf16.gmra.mxu0 %v2298
  %v2342 = vpop.f32.mrf.mxu0
  %v2343 = vadd.f32 %v2280, %v2342
  %v2344 = vpop.f32.mrf.mxu0
  %v2345 = vpop.f32.mrf.mxu0
  %v2346 = vadd.f32 %v2281, %v2345
  %v2347 = vpop.f32.mrf.mxu0
  %2348 = vdwg.mxu0
  %v2349 = vld [vmem:[%s0 + $0xf0] sm:$0xf]
  %v2350 = vld [vmem:[%s0 + $0xf4] sm:$0xf]
  %v2351 = vld [vmem:[%s0 + $0xf8] sm:$0xf]
  %v2352 = vld [vmem:[%s0 + $0xfc] sm:$0xf]
  %v2353 = vld [vmem:[%s1 + $0x280] sm:$0xff]
  %v2354 = vld [vmem:[%s1 + $0x288] sm:$0xff]
  %v2355 = vld [vmem:[%s1 + $0x290] sm:$0xff]
  %v2356 = vld [vmem:[%s1 + $0x298] sm:$0xff]
  %v2361 = vunpack.c.l.b16 %v2349
  %v2362 = vunpack.c.l.b16 %v2350
  %v2363 = vunpack.c.l.b16 %v2351
  %v2364 = vunpack.c.l.b16 %v2352
  %v2365 = vpack.c.b16 %v2362, %v2361
  %v2366 = vpack.c.b16 %v2364, %v2363
  %2369 = vmatprep.subr.bf16.mxu0 0
  %2370 = vmatpush1.bf16.msra.mxu0 0
  %2371 = vmatprep.subr.bf16.mxu0 0
  %2372 = vmatpush1.bf16.msra.mxu0 0
  %2373 = vmatprep.subr.bf16.mxu0 0
  %2374 = vmatpush1.bf16.msra.mxu0 0
  %2375 = vmatprep.subr.bf16.mxu0 0
  %2376 = vmatpush1.bf16.msra.mxu0 0
  %2377 = vmatprep.subr.bf16.mxu0 0
  %2378 = vmatpush1.bf16.msra.mxu0 0
  %2379 = vmatprep.subr.bf16.mxu0 0
  %2380 = vmatpush1.bf16.msra.mxu0 0
  %2381 = vmatprep.subr.bf16.mxu0 0
  %2382 = vmatpush1.bf16.msra.mxu0 %v2366
  %2383 = vmatprep.subr.bf16.mxu0 0
  %2384 = vmatpush1.bf16.msra.mxu0 %v2365
  %2385 = vmatprep.subr.bf16.mxu0 0
  %2386 = vmatpush2.bf16.msra.mxu0 0
  %2387 = vmatprep.subr.bf16.mxu0 0
  %2388 = vmatpush2.bf16.msra.mxu0 0
  %2389 = vmatprep.subr.bf16.mxu0 0
  %2390 = vmatpush2.bf16.msra.mxu0 0
  %2391 = vmatprep.subr.bf16.mxu0 0
  %2392 = vmatpush2.bf16.msra.mxu0 0
  %2393 = vmatprep.subr.bf16.mxu0 0
  %2394 = vmatpush2.bf16.msra.mxu0 0
  %2395 = vmatprep.subr.bf16.mxu0 0
  %2396 = vmatpush2.bf16.msra.mxu0 0
  %2397 = vmatprep.subr.bf16.mxu0 0
  %2398 = vmatpush2.bf16.msra.mxu0 0
  %2399 = vmatprep.subr.bf16.mxu0 0
  %2400 = vmatpush2.bf16.msra.mxu0 0
  %2401 = vmatprep.mubr.bf16.mxu0 0
  %2402 = vmatmul.mubr.bf16.gmra.mxu0 %v2295
  %v2403 = vpop.f32.mrf.mxu0
  %v2404 = vadd.f32 %v2353, %v2403
  %v2405 = vpop.f32.mrf.mxu0
  %v2406 = vpop.f32.mrf.mxu0
  %v2407 = vadd.f32 %v2354, %v2406
  %v2408 = vpop.f32.mrf.mxu0
  %2409 = vmatprep.mubr.bf16.mxu0 0
  %2410 = vmatmul.mubr.bf16.gmra.mxu0 %v2298
  %v2411 = vpop.f32.mrf.mxu0
  %v2412 = vadd.f32 %v2355, %v2411
  %v2413 = vpop.f32.mrf.mxu0
  %v2414 = vpop.f32.mrf.mxu0
  %v2415 = vadd.f32 %v2356, %v2414
  %v2416 = vpop.f32.mrf.mxu0
  %2417 = vdwg.mxu0
  %v2418 = vtanh.pop %v2335
  %v2419 = vtanh.pop %v2338
  %v2420 = vtanh.pop %v2343
  %v2421 = vtanh.pop %v2346
  %v2422 = vmul.f32 %v2418, %v2404
  %v2423 = vmul.f32 %v2419, %v2407
  %v2424 = vmul.f32 %v2420, %v2412
  %v2425 = vmul.f32 %v2421, %v2415
  %v2426 = vadd.f32 %v2216, %v2422
  %v2427 = vadd.f32 %v2217, %v2423
  %v2428 = vadd.f32 %v2218, %v2424
  %v2429 = vadd.f32 %v2219, %v2425
  %v2430 = vld [vmem:[%s0 + $0x100] sm:$0xf]
  %v2431 = vld [vmem:[%s0 + $0x104] sm:$0xf]
  %v2432 = vld [vmem:[%s0 + $0x108] sm:$0xf]
  %v2433 = vld [vmem:[%s0 + $0x10c] sm:$0xf]
  %v2434 = vpack.c.bf16 %v2427, %v2426
  %v2435 = vpack.c.bf16 %v2429, %v2428
  %v2440 = vunpack.c.l.b16 %v2430
  %v2441 = vunpack.c.l.b16 %v2431
  %v2442 = vunpack.c.l.b16 %v2432
  %v2443 = vunpack.c.l.b16 %v2433
  %v2444 = vpack.c.b16 %v2441, %v2440
  %v2445 = vpack.c.b16 %v2443, %v2442
  %v2447 = vsel %vm32, %v2444, 0
  %v2450 = vsel %vm32, %v2445, 0
  %2452 = vmatprep.subr.bf16.mxu0 0
  %2453 = vmatpush1.bf16.msra.mxu0 0
  %2454 = vmatprep.subr.bf16.mxu0 0
  %2455 = vmatpush1.bf16.msra.mxu0 0
  %2456 = vmatprep.subr.bf16.mxu0 0
  %2457 = vmatpush1.bf16.msra.mxu0 0
  %2458 = vmatprep.subr.bf16.mxu0 0
  %2459 = vmatpush1.bf16.msra.mxu0 0
  %2460 = vmatprep.subr.bf16.mxu0 0
  %2461 = vmatpush1.bf16.msra.mxu0 0
  %2462 = vmatprep.subr.bf16.mxu0 0
  %2463 = vmatpush1.bf16.msra.mxu0 0
  %2464 = vmatprep.subr.bf16.mxu0 0
  %2465 = vmatpush1.bf16.msra.mxu0 %v2435
  %2466 = vmatprep.subr.bf16.mxu0 0
  %2467 = vmatpush1.bf16.msra.mxu0 %v2434
  %2468 = vmatprep.subr.bf16.mxu0 0
  %2469 = vmatpush2.bf16.msra.mxu0 0
  %2470 = vmatprep.subr.bf16.mxu0 0
  %2471 = vmatpush2.bf16.msra.mxu0 0
  %2472 = vmatprep.subr.bf16.mxu0 0
  %2473 = vmatpush2.bf16.msra.mxu0 0
  %2474 = vmatprep.subr.bf16.mxu0 0
  %2475 = vmatpush2.bf16.msra.mxu0 0
  %2476 = vmatprep.subr.bf16.mxu0 0
  %2477 = vmatpush2.bf16.msra.mxu0 0
  %2478 = vmatprep.subr.bf16.mxu0 0
  %2479 = vmatpush2.bf16.msra.mxu0 0
  %2480 = vmatprep.subr.bf16.mxu0 0
  %2481 = vmatpush2.bf16.msra.mxu0 0
  %2482 = vmatprep.subr.bf16.mxu0 0
  %2483 = vmatpush2.bf16.msra.mxu0 0
  %2484 = vmatprep.mubr.bf16.mxu0 0
  %2485 = vmatmul.mubr.bf16.gmra.mxu0 %v2447
  %v2486 = vpop.f32.mrf.mxu0
  %v2487 = vadd.f32 0.0, %v2486
  %v2488 = vpop.f32.mrf.mxu0
  %v2489 = vpop.f32.mrf.mxu0
  %v2490 = vadd.f32 0.0, %v2489
  %v2491 = vpop.f32.mrf.mxu0
  %2492 = vmatprep.mubr.bf16.mxu0 0
  %2493 = vmatmul.mubr.bf16.gmra.mxu0 %v2450
  %v2494 = vpop.f32.mrf.mxu0
  %v2495 = vadd.f32 0.0, %v2494
  %v2496 = vpop.f32.mrf.mxu0
  %v2497 = vpop.f32.mrf.mxu0
  %v2498 = vadd.f32 0.0, %v2497
  %v2499 = vpop.f32.mrf.mxu0
  %2500 = vdwg.mxu0
  %v2501 = vsel %vm32, %v2487, 0.0
  %2502 = vadd.xlane.f32.xlu0 %v2501
  %v2503 = vpop.xlane.xlu0 %2502
  %v2504 = vsel %vm32, %v2490, 0.0
  %2505 = vadd.xlane.f32.xlu0 %v2504
  %v2506 = vpop.xlane.xlu0 %2505
  %v2507 = vsel %vm32, %v2495, 0.0
  %2508 = vadd.xlane.f32.xlu0 %v2507
  %v2509 = vpop.xlane.xlu0 %2508
  %v2510 = vsel %vm32, %v2498, 0.0
  %2511 = vadd.xlane.f32.xlu0 %v2510
  %v2512 = vpop.xlane.xlu0 %2511
  %v2513 = vmul.f32 %v2503, %v45
  %v2514 = vmul.f32 %v2506, %v45
  %v2515 = vmul.f32 %v2509, %v45
  %v2516 = vmul.f32 %v2512, %v45
  %v2517 = vsub.f32 %v2487, %v2513
  %v2518 = vsub.f32 %v2490, %v2514
  %v2519 = vsub.f32 %v2495, %v2515
  %v2520 = vsub.f32 %v2498, %v2516
  %v2521 = vmul.f32 %v2517, %v2517
  %v2522 = vmul.f32 %v2518, %v2518
  %v2523 = vmul.f32 %v2519, %v2519
  %v2524 = vmul.f32 %v2520, %v2520
  %v2525 = vsel %vm32, %v2521, 0.0
  %2526 = vadd.xlane.f32.xlu0 %v2525
  %v2527 = vpop.xlane.xlu0 %2526
  %v2528 = vsel %vm32, %v2522, 0.0
  %2529 = vadd.xlane.f32.xlu0 %v2528
  %v2530 = vpop.xlane.xlu0 %2529
  %v2531 = vsel %vm32, %v2523, 0.0
  %2532 = vadd.xlane.f32.xlu0 %v2531
  %v2533 = vpop.xlane.xlu0 %2532
  %v2534 = vsel %vm32, %v2524, 0.0
  %2535 = vadd.xlane.f32.xlu0 %v2534
  %v2536 = vpop.xlane.xlu0 %2535
  %v2537 = vmul.f32 %v2527, %v45
  %v2538 = vmul.f32 %v2530, %v45
  %v2539 = vmul.f32 %v2533, %v45
  %v2540 = vmul.f32 %v2536, %v45
  %v2541 = vadd.f32 %v2537, 1e-05
  %v2542 = vadd.f32 %v2538, 1e-05
  %v2543 = vadd.f32 %v2539, 1e-05
  %v2544 = vadd.f32 %v2540, 1e-05
  %v2545 = vrsqrt.pop %v2541
  %v2546 = vrsqrt.pop %v2542
  %v2547 = vrsqrt.pop %v2543
  %v2548 = vrsqrt.pop %v2544
  %v2549 = vmul.f32 %v2517, %v2545
  %v2550 = vmul.f32 %v2518, %v2546
  %v2551 = vmul.f32 %v2519, %v2547
  %v2552 = vmul.f32 %v2520, %v2548
  %v2553 = vld [vmem:[%s1 + $0x2a0] sm:$0xff]
  %v2554 = vld [vmem:[%s1 + $0x2a8] sm:$0xff]
  %v2555 = vld [vmem:[%s1 + $0x2b0] sm:$0xff]
  %v2556 = vld [vmem:[%s1 + $0x2b8] sm:$0xff]
  %v2557 = vmul.f32 %v2549, %v2553
  %v2558 = vmul.f32 %v2550, %v2554
  %v2559 = vmul.f32 %v2551, %v2555
  %v2560 = vmul.f32 %v2552, %v2556
  %v2561 = vld [vmem:[%s1 + $0x2c0] sm:$0xff]
  %v2562 = vld [vmem:[%s1 + $0x2c8] sm:$0xff]
  %v2563 = vld [vmem:[%s1 + $0x2d0] sm:$0xff]
  %v2564 = vld [vmem:[%s1 + $0x2d8] sm:$0xff]
  %v2565 = vadd.f32 %v2557, %v2561
  %v2566 = vadd.f32 %v2558, %v2562
  %v2567 = vadd.f32 %v2559, %v2563
  %v2568 = vadd.f32 %v2560, %v2564
  %v2569 = vmax.f32 %v2565, 0.0
  %v2570 = vmax.f32 %v2566, 0.0
  %v2571 = vmax.f32 %v2567, 0.0
  %v2572 = vmax.f32 %v2568, 0.0
  %v2573 = vpack.c.bf16 %v2570, %v2569
  %v2574 = vpack.c.bf16 %v2572, %v2571
  %v2575 = vld [vmem:[%s0 + $0x110] sm:$0xf]
  %v2576 = vld [vmem:[%s0 + $0x114] sm:$0xf]
  %v2577 = vld [vmem:[%s0 + $0x118] sm:$0xf]
  %v2578 = vld [vmem:[%s0 + $0x11c] sm:$0xf]
  %v2579 = vld [vmem:[%s1 + $0x2e0] sm:$0xff]
  %v2580 = vld [vmem:[%s1 + $0x2e8] sm:$0xff]
  %v2581 = vld [vmem:[%s1 + $0x2f0] sm:$0xff]
  %v2582 = vld [vmem:[%s1 + $0x2f8] sm:$0xff]
  %v2587 = vunpack.c.l.b16 %v2575
  %v2588 = vunpack.c.l.b16 %v2576
  %v2589 = vunpack.c.l.b16 %v2577
  %v2590 = vunpack.c.l.b16 %v2578
  %v2591 = vpack.c.b16 %v2588, %v2587
  %v2592 = vpack.c.b16 %v2590, %v2589
  %v2596 = vsel %vm32, %v2573, 0
  %v2599 = vsel %vm32, %v2574, 0
  %2601 = vmatprep.subr.bf16.mxu0 0
  %2602 = vmatpush1.bf16.msra.mxu0 0
  %2603 = vmatprep.subr.bf16.mxu0 0
  %2604 = vmatpush1.bf16.msra.mxu0 0
  %2605 = vmatprep.subr.bf16.mxu0 0
  %2606 = vmatpush1.bf16.msra.mxu0 0
  %2607 = vmatprep.subr.bf16.mxu0 0
  %2608 = vmatpush1.bf16.msra.mxu0 0
  %2609 = vmatprep.subr.bf16.mxu0 0
  %2610 = vmatpush1.bf16.msra.mxu0 0
  %2611 = vmatprep.subr.bf16.mxu0 0
  %2612 = vmatpush1.bf16.msra.mxu0 0
  %2613 = vmatprep.subr.bf16.mxu0 0
  %2614 = vmatpush1.bf16.msra.mxu0 %v2592
  %2615 = vmatprep.subr.bf16.mxu0 0
  %2616 = vmatpush1.bf16.msra.mxu0 %v2591
  %2617 = vmatprep.subr.bf16.mxu0 0
  %2618 = vmatpush2.bf16.msra.mxu0 0
  %2619 = vmatprep.subr.bf16.mxu0 0
  %2620 = vmatpush2.bf16.msra.mxu0 0
  %2621 = vmatprep.subr.bf16.mxu0 0
  %2622 = vmatpush2.bf16.msra.mxu0 0
  %2623 = vmatprep.subr.bf16.mxu0 0
  %2624 = vmatpush2.bf16.msra.mxu0 0
  %2625 = vmatprep.subr.bf16.mxu0 0
  %2626 = vmatpush2.bf16.msra.mxu0 0
  %2627 = vmatprep.subr.bf16.mxu0 0
  %2628 = vmatpush2.bf16.msra.mxu0 0
  %2629 = vmatprep.subr.bf16.mxu0 0
  %2630 = vmatpush2.bf16.msra.mxu0 0
  %2631 = vmatprep.subr.bf16.mxu0 0
  %2632 = vmatpush2.bf16.msra.mxu0 0
  %2633 = vmatprep.mubr.bf16.mxu0 0
  %2634 = vmatmul.mubr.bf16.gmra.mxu0 %v2596
  %v2635 = vpop.f32.mrf.mxu0
  %v2636 = vadd.f32 %v2579, %v2635
  %v2637 = vpop.f32.mrf.mxu0
  %v2638 = vpop.f32.mrf.mxu0
  %v2639 = vadd.f32 %v2580, %v2638
  %v2640 = vpop.f32.mrf.mxu0
  %2641 = vmatprep.mubr.bf16.mxu0 0
  %2642 = vmatmul.mubr.bf16.gmra.mxu0 %v2599
  %v2643 = vpop.f32.mrf.mxu0
  %v2644 = vadd.f32 %v2581, %v2643
  %v2645 = vpop.f32.mrf.mxu0
  %v2646 = vpop.f32.mrf.mxu0
  %v2647 = vadd.f32 %v2582, %v2646
  %v2648 = vpop.f32.mrf.mxu0
  %2649 = vdwg.mxu0
  %2650 = vst.msk [vmem:[%s2] sm:$0xff] %vm32, %v2636
  %2651 = vst.msk [vmem:[%s2 + $0x8] sm:$0xff] %vm32, %v2639
  %2652 = vst.msk [vmem:[%s2 + $0x10] sm:$0xff] %vm32, %v2644
  %2653 = vst.msk [vmem:[%s2 + $0x18] sm:$0xff] %vm32, %v2647
  // Predicated region
  $region10: #{excelformer_forward.1} parent=0 // pred_check
    _
  $region11: #{excelformer_forward.1} parent=0 // pred_check_branch
    %2655 = sbr.rel (0) target = $region13
  $region12: #{excelformer_forward.1} parent=0 // pred_region
    _
  $region13: #{excelformer_forward.1} parent=0 // pred_fallthru
    _
  // Predicated region
  $region14: #{excelformer_forward.1} parent=0 // pred_check
    _
  $region15: #{excelformer_forward.1} parent=0 // pred_check_branch
    %2657 = sbr.rel (0) target = $region17
  $region16: #{excelformer_forward.1} parent=0 // pred_region
    _
  $region17: #{excelformer_forward.1} parent=0 // pred_fallthru
    _

</llo_original>
